<compile_context>
chip_gen: v7x
topology: tpu7x:2x2x1
jax: 0.10.0
libtpu: 0.0.40
codegen_flags: <defaults>
</compile_context>

<pallas_src>
import jax
import jax.numpy as jnp
from jax import lax
from jax.experimental import pallas as pl
from jax.experimental.pallas import tpu as pltpu


def _round_up(x, m):
    return ((x + m - 1) // m) * m


def _pick_tile(dim, max_tile, aligns=(256, 128, 8)):
    """Largest tile <= max_tile that divides `dim`, preferring MXU-friendly
    multiples (256 on v6e/v7x, 128 on v5e); falls back to the full dim."""
    if dim <= max_tile:
        return dim
    for align in aligns:
        t = (max_tile // align) * align
        while t >= align:
            if dim % t == 0:
                return t
            t -= align
    return dim


def _vmem_limit_bytes(default=32 * 1024 * 1024):
    """Device-adaptive scoped-VMEM budget: ~0.8x physical capacity
    (~102 MiB on v5e/v6e, ~51 MiB on v7x); safe fallback otherwise."""
    try:
        info = pltpu.get_tpu_info()
        cap = getattr(info, "vmem_capacity_bytes", None)
        if cap:
            return max(default, min(int(0.8 * cap), cap - (8 << 20)))
    except Exception:
        pass
    return default


# ---------------------------------------------------------------------------
# Kernel A: fused batched input projection + sequential LSTM recurrence.
#   Grid: one program per batch shard ("parallel" -> both TCs on v7x).
#   Layout: time-major (T, bshard, *) so every per-step slab is an aligned
#   whole tile indexed by the leading axis (no pl.ds on the serial path).
# ---------------------------------------------------------------------------
def _lstm_recurrence_kernel(x_ref, wih_ref, whh_ref, b_ref, hs_ref, gx_scr):
    T, bshard, E = x_ref.shape
    H = whh_ref.shape[0]

    # (1) Input projection for ALL timesteps in one MXU GEMM
    #     (bf16 operands, f32 accumulation): gx = X @ W_ih^T + (b_ih + b_hh).
    # TODO(synk): at very large T*bshard (v7x 64 MiB VMEM) chunk gx over time
    # (compute X-chunk @ W_ih inside the loop) or store gx in bf16.
    x2d = x_ref[...].reshape(T * bshard, E)
    gx = jnp.dot(x2d, wih_ref[...], preferred_element_type=jnp.float32)
    gx_scr[...] = (gx + b_ref[...]).reshape(T, bshard, 4 * H)

    whh = whh_ref[...]                          # (H, 4H) bf16, loaded once

    def sigmoid(v):                             # single EUP tanh per gate
        return 0.5 * jnp.tanh(0.5 * v) + 0.5

    # (2) Recurrence: per step only h @ W_hh^T + gate nonlinearities, with
    #     (h, c) carried in registers; h_t written as one aligned tile.
    def step(t, carry):
        h, c = carry                            # f32 (bshard, H)
        gates = gx_scr[t] + jnp.dot(h.astype(whh.dtype), whh,
                                    preferred_element_type=jnp.float32)
        i_g = sigmoid(gates[:, 0 * H:1 * H])
        f_g = sigmoid(gates[:, 1 * H:2 * H])
        g_g = jnp.tanh(gates[:, 2 * H:3 * H])
        o_g = sigmoid(gates[:, 3 * H:4 * H])
        c_new = f_g * c + i_g * g_g
        h_new = o_g * jnp.tanh(c_new)
        hs_ref[t] = h_new.astype(hs_ref.dtype)
        return (h_new, c_new)

    h0 = jnp.zeros((bshard, H), jnp.float32)    # nn.LSTM default zero state
    c0 = jnp.zeros((bshard, H), jnp.float32)
    lax.fori_loop(0, T, step, (h0, c0), unroll=True)


# ---------------------------------------------------------------------------
# Kernel B: batched, lane-dense output projection over the flattened (B*T)
# rows (full MXU M-dimension fill), tiled (M, V), all-"parallel".
# ---------------------------------------------------------------------------
def _output_proj_kernel(h_ref, w_ref, b_ref, o_ref):
    o_ref[...] = (
        jnp.dot(h_ref[...], w_ref[...], preferred_element_type=jnp.float32)
        + b_ref[...]).astype(o_ref.dtype)


def decoder_rnn_forward(features, captions, params):
    """features: (B, E) f32, captions: (B, L) int32 -> (B, L, V) f32 logits."""
    embed_w = params["embed"]              # (V, E)
    w_ih = params["w_ih"]                  # (4H, E)  PyTorch layout
    w_hh = params["w_hh"]                  # (4H, H)
    b = params["b_ih"] + params["b_hh"]    # (4H,)
    w_out = params["w_out"]                # (V, H)
    b_out = params["b_out"]                # (V,)

    # ---- glue (plain JAX): embedding gather + concat ------------------------
    embeds = jnp.take(embed_w, captions[:, :-1], axis=0)              # (B,T-1,E)
    inputs = jnp.concatenate([features[:, None, :], embeds], axis=1)  # (B,T,E)
    B, T, E = inputs.shape
    H = w_hh.shape[1]
    V = w_out.shape[0]

    # ---- batch padding / sharding across TensorCores ------------------------
    n_shards = 2 if B >= 16 else 1         # 2 shards -> both TCs on v7x
    bshard = _round_up(-(-B // n_shards), 8)   # aligned sublane slabs
    B_pad = bshard * n_shards
    if B_pad != B:
        inputs = jnp.pad(inputs, ((0, B_pad - B), (0, 0), (0, 0)))

    # Time-major view of the (small) inputs; bf16 MXU operands.
    x_tm = jnp.transpose(inputs, (1, 0, 2)).astype(jnp.bfloat16)      # (T,Bp,E)
    wih_t = jnp.transpose(w_ih).astype(jnp.bfloat16)                  # (E, 4H)
    whh_t = jnp.transpose(w_hh).astype(jnp.bfloat16)                  # (H, 4H)
    b2d = b.reshape(1, 4 * H).astype(jnp.float32)                     # (1, 4H)
    wout_t = jnp.transpose(w_out).astype(jnp.bfloat16)                # (H, V)
    bout2d = b_out.reshape(1, V).astype(jnp.float32)                  # (1, V)

    vmem_limit = _vmem_limit_bytes()

    # ---- Kernel A: batch-sharded recurrence ---------------------------------
    hs_tm = pl.pallas_call(
        _lstm_recurrence_kernel,
        out_shape=jax.ShapeDtypeStruct((T, B_pad, H), jnp.bfloat16),
        grid=(n_shards,),
        in_specs=[
            pl.BlockSpec((T, bshard, E), lambda s: (0, s, 0)),        # x
            pl.BlockSpec((E, 4 * H), lambda s: (0, 0)),               # W_ih^T
            pl.BlockSpec((H, 4 * H), lambda s: (0, 0)),               # W_hh^T
            pl.BlockSpec((1, 4 * H), lambda s: (0, 0)),               # bias
        ],
        out_specs=pl.BlockSpec((T, bshard, H), lambda s: (0, s, 0)),
        scratch_shapes=[pltpu.VMEM((T, bshard, 4 * H), jnp.float32)],  # gx
        compiler_params=pltpu.CompilerParams(
            dimension_semantics=("parallel",),
            vmem_limit_bytes=vmem_limit),
    )(x_tm, wih_t, whh_t, b2d)

    # Small hidden-sized relayout only; the large (B,T,V) logits tensor is
    # produced batch-first directly by Kernel B (free reshape, no transpose).
    # TODO(synk): when hs and W_out both fit VMEM, fuse this projection into
    # Kernel A to drop the hs HBM round trip.
    hs_flat = jnp.transpose(hs_tm, (1, 0, 2)).reshape(B_pad * T, H)   # bf16

    # ---- Kernel B: (B*T, H) @ (H, V) lane-dense projection ------------------
    M = B_pad * T
    tM = _pick_tile(M, 512)
    tV = _pick_tile(V, 2048)
    grid = (M // tM, V // tV)

    out_flat = pl.pallas_call(
        _output_proj_kernel,
        out_shape=jax.ShapeDtypeStruct((M, V), jnp.float32),
        grid=grid,
        in_specs=[
            pl.BlockSpec((tM, H), lambda m, v: (m, 0)),               # hs rows
            pl.BlockSpec((H, tV), lambda m, v: (0, v)),               # W_out^T
            pl.BlockSpec((1, tV), lambda m, v: (0, v)),               # b_out
        ],
        out_specs=pl.BlockSpec((tM, tV), lambda m, v: (m, v)),
        compiler_params=pltpu.CompilerParams(
            dimension_semantics=("parallel", "parallel"),
            vmem_limit_bytes=vmem_limit),
    )(hs_flat, wout_t, bout2d)

    # Free view: contiguous batch-first rows -> (B_pad, T, V); drop padding.
    return out_flat.reshape(B_pad, T, V)[:B]


# ---------------------------------------------------------------------------
# Pure-JAX f32 reference (lax.scan LSTM) for validation.
# ---------------------------------------------------------------------------
def _reference_forward(features, captions, params):
    embed_w = params["embed"]
    w_ih, w_hh = params["w_ih"], params["w_hh"]
    b = params["b_ih"] + params["b_hh"]
    w_out, b_out = params["w_out"], params["b_out"]
    H = w_hh.shape[1]

    embeds = jnp.take(embed_w, captions[:, :-1], axis=0)
    inputs = jnp.concatenate([features[:, None, :], embeds], axis=1)  # (B,T,E)
    x_tm = jnp.transpose(inputs, (1, 0, 2))
    B = x_tm.shape[1]

    def step(carry, x):
        h, c = carry
        gates = x @ w_ih.T + h @ w_hh.T + b
        i = jax.nn.sigmoid(gates[:, 0 * H:1 * H])
        f = jax.nn.sigmoid(gates[:, 1 * H:2 * H])
        g = jnp.tanh(gates[:, 2 * H:3 * H])
        o = jax.nn.sigmoid(gates[:, 3 * H:4 * H])
        c = f * c + i * g
        h = o * jnp.tanh(c)
        return (h, c), h

    h0 = jnp.zeros((B, H), jnp.float32)
    _, hs = jax.lax.scan(step, (h0, h0), x_tm)
    hiddens = jnp.transpose(hs, (1, 0, 2))          # (B, T, H)
    return hiddens @ w_out.T + b_out


def make_params(key, embed_size, hidden_size, vocab_size):
    ks = jax.random.split(key, 7)
    s = 0.1
    return {
        "embed": s * jax.random.normal(ks[0], (vocab_size, embed_size), jnp.float32),
        "w_ih": s * jax.random.normal(ks[1], (4 * hidden_size, embed_size), jnp.float32),
        "w_hh": s * jax.random.normal(ks[2], (4 * hidden_size, hidden_size), jnp.float32),
        "b_ih": s * jax.random.normal(ks[3], (4 * hidden_size,), jnp.float32),
        "b_hh": s * jax.random.normal(ks[4], (4 * hidden_size,), jnp.float32),
        "w_out": s * jax.random.normal(ks[5], (vocab_size, hidden_size), jnp.float32),
        "b_out": s * jax.random.normal(ks[6], (vocab_size,), jnp.float32),
    }


if __name__ == "__main__":
    B = 2
    embed_size = 32
    hidden_size = 32     # 4H = 128 -> lane-dense gate slab
    vocab_size = 128     # lane-dense projection output
    caption_len = 8      # captions[:, :-1] -> 7 embeds, + features -> T = 8

    key = jax.random.PRNGKey(0)
    pkey, fkey, ckey = jax.random.split(key, 3)
    params = make_params(pkey, embed_size, hidden_size, vocab_size)

    features = jax.random.normal(fkey, (B, embed_size), jnp.float32)
    captions = jax.random.randint(ckey, (B, caption_len), 0, vocab_size, jnp.int32)

    fwd = jax.jit(decoder_rnn_forward)
    out = jax.block_until_ready(fwd(features, captions, params))

    ref = _reference_forward(features, captions, params)
    assert out.shape == (B, caption_len, vocab_size), out.shape
    err = float(jnp.max(jnp.abs(out - ref)))
    # bf16 MXU operands with f32 accumulation -> compare at bf16-level tol.
    assert err < 5e-2, f"max abs error {err}"

    print("KERNEL_OK")
</pallas_src>

<mosaic_0001>
module attributes {stable_mosaic.version = 11 : i64} {
  func.func @_output_proj_kernel(%arg0: i32, %arg1: i32, %arg2: memref<64x32xbf16, #tpu.memory_space<vmem>>, %arg3: memref<32x128xbf16, #tpu.memory_space<vmem>>, %arg4: memref<1x128xf32, #tpu.memory_space<vmem>>, %arg5: memref<64x128xf32, #tpu.memory_space<vmem>>) attributes {dimension_semantics = [#tpu.dimension_semantics<parallel>, #tpu.dimension_semantics<parallel>], iteration_bounds = array<i64: 1, 1>, scalar_prefetch = 0 : i64, scratch_operands = 0 : i64, tpu.core_type = #tpu.core_type<tc>, window_params = [{transform_indices = @transform_0, window_bounds = array<i64: 64, 32>}, {transform_indices = @transform_1, window_bounds = array<i64: 32, 128>}, {transform_indices = @transform_2, window_bounds = array<i64: 1, 128>}, {transform_indices = @transform_3, window_bounds = array<i64: 64, 128>}]} {
    %c0 = arith.constant 0 : index
    %c0_0 = arith.constant 0 : index
    %0 = vector.load %arg2[%c0, %c0_0] : memref<64x32xbf16, #tpu.memory_space<vmem>>, vector<64x32xbf16>
    %c0_1 = arith.constant 0 : index
    %c0_2 = arith.constant 0 : index
    %1 = vector.load %arg3[%c0_1, %c0_2] : memref<32x128xbf16, #tpu.memory_space<vmem>>, vector<32x128xbf16>
    %cst = arith.constant dense<0.000000e+00> : vector<64x128xf32>
    %2 = tpu.matmul %0, %1, %cst {dimension_numbers = #tpu.dot_dimension_numbers<[1], [0], [0], [1], [0, 0, 1, 1], [], []>} : vector<64x32xbf16>, vector<32x128xbf16>, vector<64x128xf32> -> vector<64x128xf32>
    %c0_3 = arith.constant 0 : index
    %c0_4 = arith.constant 0 : index
    %3 = vector.load %arg4[%c0_3, %c0_4] : memref<1x128xf32, #tpu.memory_space<vmem>>, vector<1x128xf32>
    %4 = vector.broadcast %3 : vector<1x128xf32> to vector<64x128xf32>
    %5 = arith.addf %2, %4 : vector<64x128xf32>
    %c0_5 = arith.constant 0 : index
    %c0_6 = arith.constant 0 : index
    %6 = vector.load %arg5[%c0_5, %c0_6] : memref<64x128xf32, #tpu.memory_space<vmem>>, vector<64x128xf32>
    tpu.vector_store %arg5[%c0_5, %c0_6], %5 {strides = array<i32>} : memref<64x128xf32, #tpu.memory_space<vmem>>, vector<64x128xf32>,
    return
  }
  func.func @transform_0(%arg0: i32, %arg1: i32) -> (i32, i32) {
    %c0_i32 = arith.constant 0 : i32
    %c0_i32_0 = arith.constant 0 : i32
    return %arg0, %c0_i32 : i32, i32
  }
  func.func @transform_1(%arg0: i32, %arg1: i32) -> (i32, i32) {
    %c0_i32 = arith.constant 0 : i32
    %c0_i32_0 = arith.constant 0 : i32
    return %c0_i32, %arg1 : i32, i32
  }
  func.func @transform_2(%arg0: i32, %arg1: i32) -> (i32, i32) {
    %c0_i32 = arith.constant 0 : i32
    %c0_i32_0 = arith.constant 0 : i32
    return %c0_i32, %arg1 : i32, i32
  }
  func.func @transform_3(%arg0: i32, %arg1: i32) -> (i32, i32) {
    %c0_i32 = arith.constant 0 : i32
    return %arg0, %arg1 : i32, i32
  }
}

module attributes {stable_mosaic.version = 11 : i64} {
  func.func @_lstm_recurrence_kernel(%arg0: i32, %arg1: memref<8x8x32xbf16, #tpu.memory_space<vmem>>, %arg2: memref<32x128xbf16, #tpu.memory_space<vmem>>, %arg3: memref<32x128xbf16, #tpu.memory_space<vmem>>, %arg4: memref<1x128xf32, #tpu.memory_space<vmem>>, %arg5: memref<8x8x32xbf16, #tpu.memory_space<vmem>>, %arg6: memref<8x8x128xf32, #tpu.memory_space<vmem>>) attributes {dimension_semantics = [#tpu.dimension_semantics<parallel>], iteration_bounds = array<i64: 1>, scalar_prefetch = 0 : i64, scratch_operands = 1 : i64, tpu.core_type = #tpu.core_type<tc>, window_params = [{transform_indices = @transform_0, window_bounds = array<i64: 8, 8, 32>}, {pipeline_mode = #tpu.pipeline_mode<synchronous>, transform_indices = @transform_1, window_bounds = array<i64: 32, 128>}, {pipeline_mode = #tpu.pipeline_mode<synchronous>, transform_indices = @transform_2, window_bounds = array<i64: 32, 128>}, {pipeline_mode = #tpu.pipeline_mode<synchronous>, transform_indices = @transform_3, window_bounds = array<i64: 1, 128>}, {transform_indices = @transform_4, window_bounds = array<i64: 8, 8, 32>}]} {
    %c0 = arith.constant 0 : index
    %c0_0 = arith.constant 0 : index
    %c0_1 = arith.constant 0 : index
    %0 = vector.load %arg1[%c0, %c0_0, %c0_1] : memref<8x8x32xbf16, #tpu.memory_space<vmem>>, vector<8x8x32xbf16>
    %1 = vector.shape_cast %0 : vector<8x8x32xbf16> to vector<64x32xbf16>
    %c0_2 = arith.constant 0 : index
    %c0_3 = arith.constant 0 : index
    %2 = vector.load %arg2[%c0_2, %c0_3] : memref<32x128xbf16, #tpu.memory_space<vmem>>, vector<32x128xbf16>
    %cst = arith.constant dense<0.000000e+00> : vector<64x128xf32>
    %3 = tpu.matmul %1, %2, %cst {dimension_numbers = #tpu.dot_dimension_numbers<[1], [0], [0], [1], [0, 0, 1, 1], [], []>} : vector<64x32xbf16>, vector<32x128xbf16>, vector<64x128xf32> -> vector<64x128xf32>
    %c0_4 = arith.constant 0 : index
    %c0_5 = arith.constant 0 : index
    %4 = vector.load %arg4[%c0_4, %c0_5] : memref<1x128xf32, #tpu.memory_space<vmem>>, vector<1x128xf32>
    %5 = vector.broadcast %4 : vector<1x128xf32> to vector<64x128xf32>
    %6 = arith.addf %3, %5 : vector<64x128xf32>
    %7 = vector.shape_cast %6 : vector<64x128xf32> to vector<8x8x128xf32>
    %c0_6 = arith.constant 0 : index
    %c0_7 = arith.constant 0 : index
    %c0_8 = arith.constant 0 : index
    %8 = vector.load %arg6[%c0_6, %c0_7, %c0_8] : memref<8x8x128xf32, #tpu.memory_space<vmem>>, vector<8x8x128xf32>
    tpu.vector_store %arg6[%c0_6, %c0_7, %c0_8], %7 {strides = array<i32>} : memref<8x8x128xf32, #tpu.memory_space<vmem>>, vector<8x8x128xf32>,
    %c0_9 = arith.constant 0 : index
    %c0_10 = arith.constant 0 : index
    %9 = vector.load %arg3[%c0_9, %c0_10] : memref<32x128xbf16, #tpu.memory_space<vmem>>, vector<32x128xbf16>
    %cst_11 = arith.constant 0.000000e+00 : f32
    %10 = vector.broadcast %cst_11 : f32 to vector<8x32xf32>
    %cst_12 = arith.constant 0.000000e+00 : f32
    %11 = vector.broadcast %cst_12 : f32 to vector<8x32xf32>
    %c0_i32 = arith.constant 0 : i32
    %12 = arith.index_cast %c0_i32 : i32 to index
    %c0_13 = arith.constant 0 : index
    %c0_14 = arith.constant 0 : index
    %13 = vector.load %arg6[%12, %c0_13, %c0_14] : memref<8x8x128xf32, #tpu.memory_space<vmem>>, vector<1x8x128xf32>
    %14 = vector.shape_cast %13 : vector<1x8x128xf32> to vector<8x128xf32>
    %15 = arith.truncf %10 : vector<8x32xf32> to vector<8x32xbf16>
    %cst_15 = arith.constant dense<0.000000e+00> : vector<8x128xf32>
    %16 = tpu.matmul %15, %9, %cst_15 {dimension_numbers = #tpu.dot_dimension_numbers<[1], [0], [0], [1], [0, 0, 1, 1], [], []>} : vector<8x32xbf16>, vector<32x128xbf16>, vector<8x128xf32> -> vector<8x128xf32>
    %17 = arith.addf %14, %16 : vector<8x128xf32>
    %18 = vector.extract_strided_slice %17 {offsets = [0, 0], sizes = [8, 32], strides = [1, 1]} : vector<8x128xf32> to vector<8x32xf32>
    %cst_16 = arith.constant 5.000000e-01 : f32
    %19 = vector.broadcast %cst_16 : f32 to vector<8x32xf32>
    %20 = arith.mulf %19, %18 : vector<8x32xf32>
    %21 = math.tanh %20 : vector<8x32xf32>
    %cst_17 = arith.constant 5.000000e-01 : f32
    %22 = vector.broadcast %cst_17 : f32 to vector<8x32xf32>
    %23 = arith.mulf %22, %21 : vector<8x32xf32>
    %cst_18 = arith.constant 5.000000e-01 : f32
    %24 = vector.broadcast %cst_18 : f32 to vector<8x32xf32>
    %25 = arith.addf %23, %24 : vector<8x32xf32>
    %26 = vector.extract_strided_slice %17 {offsets = [0, 32], sizes = [8, 32], strides = [1, 1]} : vector<8x128xf32> to vector<8x32xf32>
    %cst_19 = arith.constant 5.000000e-01 : f32
    %27 = vector.broadcast %cst_19 : f32 to vector<8x32xf32>
    %28 = arith.mulf %27, %26 : vector<8x32xf32>
    %29 = math.tanh %28 : vector<8x32xf32>
    %cst_20 = arith.constant 5.000000e-01 : f32
    %30 = vector.broadcast %cst_20 : f32 to vector<8x32xf32>
    %31 = arith.mulf %30, %29 : vector<8x32xf32>
    %cst_21 = arith.constant 5.000000e-01 : f32
    %32 = vector.broadcast %cst_21 : f32 to vector<8x32xf32>
    %33 = arith.addf %31, %32 : vector<8x32xf32>
    %34 = vector.extract_strided_slice %17 {offsets = [0, 64], sizes = [8, 32], strides = [1, 1]} : vector<8x128xf32> to vector<8x32xf32>
    %35 = math.tanh %34 : vector<8x32xf32>
    %36 = vector.extract_strided_slice %17 {offsets = [0, 96], sizes = [8, 32], strides = [1, 1]} : vector<8x128xf32> to vector<8x32xf32>
    %cst_22 = arith.constant 5.000000e-01 : f32
    %37 = vector.broadcast %cst_22 : f32 to vector<8x32xf32>
    %38 = arith.mulf %37, %36 : vector<8x32xf32>
    %39 = math.tanh %38 : vector<8x32xf32>
    %cst_23 = arith.constant 5.000000e-01 : f32
    %40 = vector.broadcast %cst_23 : f32 to vector<8x32xf32>
    %41 = arith.mulf %40, %39 : vector<8x32xf32>
    %cst_24 = arith.constant 5.000000e-01 : f32
    %42 = vector.broadcast %cst_24 : f32 to vector<8x32xf32>
    %43 = arith.addf %41, %42 : vector<8x32xf32>
    %44 = arith.mulf %33, %11 : vector<8x32xf32>
    %45 = arith.mulf %25, %35 : vector<8x32xf32>
    %46 = arith.addf %44, %45 : vector<8x32xf32>
    %47 = math.tanh %46 : vector<8x32xf32>
    %48 = arith.mulf %43, %47 : vector<8x32xf32>
    %49 = arith.truncf %48 : vector<8x32xf32> to vector<8x32xbf16>
    %50 = arith.index_cast %c0_i32 : i32 to index
    %c0_25 = arith.constant 0 : index
    %c0_26 = arith.constant 0 : index
    %51 = vector.load %arg5[%50, %c0_25, %c0_26] : memref<8x8x32xbf16, #tpu.memory_space<vmem>>, vector<1x8x32xbf16>
    %52 = vector.shape_cast %51 : vector<1x8x32xbf16> to vector<8x32xbf16>
    %53 = vector.shape_cast %49 : vector<8x32xbf16> to vector<1x8x32xbf16>
    tpu.vector_store %arg5[%50, %c0_25, %c0_26], %53 {strides = array<i32>} : memref<8x8x32xbf16, #tpu.memory_space<vmem>>, vector<1x8x32xbf16>,
    %c1_i32 = arith.constant 1 : i32
    %54 = arith.index_cast %c1_i32 : i32 to index
    %c0_27 = arith.constant 0 : index
    %c0_28 = arith.constant 0 : index
    %55 = vector.load %arg6[%54, %c0_27, %c0_28] : memref<8x8x128xf32, #tpu.memory_space<vmem>>, vector<1x8x128xf32>
    %56 = vector.shape_cast %55 : vector<1x8x128xf32> to vector<8x128xf32>
    %57 = arith.truncf %48 : vector<8x32xf32> to vector<8x32xbf16>
    %cst_29 = arith.constant dense<0.000000e+00> : vector<8x128xf32>
    %58 = tpu.matmul %57, %9, %cst_29 {dimension_numbers = #tpu.dot_dimension_numbers<[1], [0], [0], [1], [0, 0, 1, 1], [], []>} : vector<8x32xbf16>, vector<32x128xbf16>, vector<8x128xf32> -> vector<8x128xf32>
    %59 = arith.addf %56, %58 : vector<8x128xf32>
    %60 = vector.extract_strided_slice %59 {offsets = [0, 0], sizes = [8, 32], strides = [1, 1]} : vector<8x128xf32> to vector<8x32xf32>
    %cst_30 = arith.constant 5.000000e-01 : f32
    %61 = vector.broadcast %cst_30 : f32 to vector<8x32xf32>
    %62 = arith.mulf %61, %60 : vector<8x32xf32>
    %63 = math.tanh %62 : vector<8x32xf32>
    %cst_31 = arith.constant 5.000000e-01 : f32
    %64 = vector.broadcast %cst_31 : f32 to vector<8x32xf32>
    %65 = arith.mulf %64, %63 : vector<8x32xf32>
    %cst_32 = arith.constant 5.000000e-01 : f32
    %66 = vector.broadcast %cst_32 : f32 to vector<8x32xf32>
    %67 = arith.addf %65, %66 : vector<8x32xf32>
    %68 = vector.extract_strided_slice %59 {offsets = [0, 32], sizes = [8, 32], strides = [1, 1]} : vector<8x128xf32> to vector<8x32xf32>
    %cst_33 = arith.constant 5.000000e-01 : f32
    %69 = vector.broadcast %cst_33 : f32 to vector<8x32xf32>
    %70 = arith.mulf %69, %68 : vector<8x32xf32>
    %71 = math.tanh %70 : vector<8x32xf32>
    %cst_34 = arith.constant 5.000000e-01 : f32
    %72 = vector.broadcast %cst_34 : f32 to vector<8x32xf32>
    %73 = arith.mulf %72, %71 : vector<8x32xf32>
    %cst_35 = arith.constant 5.000000e-01 : f32
    %74 = vector.broadcast %cst_35 : f32 to vector<8x32xf32>
    %75 = arith.addf %73, %74 : vector<8x32xf32>
    %76 = vector.extract_strided_slice %59 {offsets = [0, 64], sizes = [8, 32], strides = [1, 1]} : vector<8x128xf32> to vector<8x32xf32>
    %77 = math.tanh %76 : vector<8x32xf32>
    %78 = vector.extract_strided_slice %59 {offsets = [0, 96], sizes = [8, 32], strides = [1, 1]} : vector<8x128xf32> to vector<8x32xf32>
    %cst_36 = arith.constant 5.000000e-01 : f32
    %79 = vector.broadcast %cst_36 : f32 to vector<8x32xf32>
    %80 = arith.mulf %79, %78 : vector<8x32xf32>
    %81 = math.tanh %80 : vector<8x32xf32>
    %cst_37 = arith.constant 5.000000e-01 : f32
    %82 = vector.broadcast %cst_37 : f32 to vector<8x32xf32>
    %83 = arith.mulf %82, %81 : vector<8x32xf32>
    %cst_38 = arith.constant 5.000000e-01 : f32
    %84 = vector.broadcast %cst_38 : f32 to vector<8x32xf32>
    %85 = arith.addf %83, %84 : vector<8x32xf32>
    %86 = arith.mulf %75, %46 : vector<8x32xf32>
    %87 = arith.mulf %67, %77 : vector<8x32xf32>
    %88 = arith.addf %86, %87 : vector<8x32xf32>
    %89 = math.tanh %88 : vector<8x32xf32>
    %90 = arith.mulf %85, %89 : vector<8x32xf32>
    %91 = arith.truncf %90 : vector<8x32xf32> to vector<8x32xbf16>
    %92 = arith.index_cast %c1_i32 : i32 to index
    %c0_39 = arith.constant 0 : index
    %c0_40 = arith.constant 0 : index
    %93 = vector.load %arg5[%92, %c0_39, %c0_40] : memref<8x8x32xbf16, #tpu.memory_space<vmem>>, vector<1x8x32xbf16>
    %94 = vector.shape_cast %93 : vector<1x8x32xbf16> to vector<8x32xbf16>
    %95 = vector.shape_cast %91 : vector<8x32xbf16> to vector<1x8x32xbf16>
    tpu.vector_store %arg5[%92, %c0_39, %c0_40], %95 {strides = array<i32>} : memref<8x8x32xbf16, #tpu.memory_space<vmem>>, vector<1x8x32xbf16>,
    %c2_i32 = arith.constant 2 : i32
    %96 = arith.index_cast %c2_i32 : i32 to index
    %c0_41 = arith.constant 0 : index
    %c0_42 = arith.constant 0 : index
    %97 = vector.load %arg6[%96, %c0_41, %c0_42] : memref<8x8x128xf32, #tpu.memory_space<vmem>>, vector<1x8x128xf32>
    %98 = vector.shape_cast %97 : vector<1x8x128xf32> to vector<8x128xf32>
    %99 = arith.truncf %90 : vector<8x32xf32> to vector<8x32xbf16>
    %cst_43 = arith.constant dense<0.000000e+00> : vector<8x128xf32>
    %100 = tpu.matmul %99, %9, %cst_43 {dimension_numbers = #tpu.dot_dimension_numbers<[1], [0], [0], [1], [0, 0, 1, 1], [], []>} : vector<8x32xbf16>, vector<32x128xbf16>, vector<8x128xf32> -> vector<8x128xf32>
    %101 = arith.addf %98, %100 : vector<8x128xf32>
    %102 = vector.extract_strided_slice %101 {offsets = [0, 0], sizes = [8, 32], strides = [1, 1]} : vector<8x128xf32> to vector<8x32xf32>
    %cst_44 = arith.constant 5.000000e-01 : f32
    %103 = vector.broadcast %cst_44 : f32 to vector<8x32xf32>
    %104 = arith.mulf %103, %102 : vector<8x32xf32>
    %105 = math.tanh %104 : vector<8x32xf32>
    %cst_45 = arith.constant 5.000000e-01 : f32
    %106 = vector.broadcast %cst_45 : f32 to vector<8x32xf32>
    %107 = arith.mulf %106, %105 : vector<8x32xf32>
    %cst_46 = arith.constant 5.000000e-01 : f32
    %108 = vector.broadcast %cst_46 : f32 to vector<8x32xf32>
    %109 = arith.addf %107, %108 : vector<8x32xf32>
    %110 = vector.extract_strided_slice %101 {offsets = [0, 32], sizes = [8, 32], strides = [1, 1]} : vector<8x128xf32> to vector<8x32xf32>
    %cst_47 = arith.constant 5.000000e-01 : f32
    %111 = vector.broadcast %cst_47 : f32 to vector<8x32xf32>
    %112 = arith.mulf %111, %110 : vector<8x32xf32>
    %113 = math.tanh %112 : vector<8x32xf32>
    %cst_48 = arith.constant 5.000000e-01 : f32
    %114 = vector.broadcast %cst_48 : f32 to vector<8x32xf32>
    %115 = arith.mulf %114, %113 : vector<8x32xf32>
    %cst_49 = arith.constant 5.000000e-01 : f32
    %116 = vector.broadcast %cst_49 : f32 to vector<8x32xf32>
    %117 = arith.addf %115, %116 : vector<8x32xf32>
    %118 = vector.extract_strided_slice %101 {offsets = [0, 64], sizes = [8, 32], strides = [1, 1]} : vector<8x128xf32> to vector<8x32xf32>
    %119 = math.tanh %118 : vector<8x32xf32>
    %120 = vector.extract_strided_slice %101 {offsets = [0, 96], sizes = [8, 32], strides = [1, 1]} : vector<8x128xf32> to vector<8x32xf32>
    %cst_50 = arith.constant 5.000000e-01 : f32
    %121 = vector.broadcast %cst_50 : f32 to vector<8x32xf32>
    %122 = arith.mulf %121, %120 : vector<8x32xf32>
    %123 = math.tanh %122 : vector<8x32xf32>
    %cst_51 = arith.constant 5.000000e-01 : f32
    %124 = vector.broadcast %cst_51 : f32 to vector<8x32xf32>
    %125 = arith.mulf %124, %123 : vector<8x32xf32>
    %cst_52 = arith.constant 5.000000e-01 : f32
    %126 = vector.broadcast %cst_52 : f32 to vector<8x32xf32>
    %127 = arith.addf %125, %126 : vector<8x32xf32>
    %128 = arith.mulf %117, %88 : vector<8x32xf32>
    %129 = arith.mulf %109, %119 : vector<8x32xf32>
    %130 = arith.addf %128, %129 : vector<8x32xf32>
    %131 = math.tanh %130 : vector<8x32xf32>
    %132 = arith.mulf %127, %131 : vector<8x32xf32>
    %133 = arith.truncf %132 : vector<8x32xf32> to vector<8x32xbf16>
    %134 = arith.index_cast %c2_i32 : i32 to index
    %c0_53 = arith.constant 0 : index
    %c0_54 = arith.constant 0 : index
    %135 = vector.load %arg5[%134, %c0_53, %c0_54] : memref<8x8x32xbf16, #tpu.memory_space<vmem>>, vector<1x8x32xbf16>
    %136 = vector.shape_cast %135 : vector<1x8x32xbf16> to vector<8x32xbf16>
    %137 = vector.shape_cast %133 : vector<8x32xbf16> to vector<1x8x32xbf16>
    tpu.vector_store %arg5[%134, %c0_53, %c0_54], %137 {strides = array<i32>} : memref<8x8x32xbf16, #tpu.memory_space<vmem>>, vector<1x8x32xbf16>,
    %c3_i32 = arith.constant 3 : i32
    %138 = arith.index_cast %c3_i32 : i32 to index
    %c0_55 = arith.constant 0 : index
    %c0_56 = arith.constant 0 : index
    %139 = vector.load %arg6[%138, %c0_55, %c0_56] : memref<8x8x128xf32, #tpu.memory_space<vmem>>, vector<1x8x128xf32>
    %140 = vector.shape_cast %139 : vector<1x8x128xf32> to vector<8x128xf32>
    %141 = arith.truncf %132 : vector<8x32xf32> to vector<8x32xbf16>
    %cst_57 = arith.constant dense<0.000000e+00> : vector<8x128xf32>
    %142 = tpu.matmul %141, %9, %cst_57 {dimension_numbers = #tpu.dot_dimension_numbers<[1], [0], [0], [1], [0, 0, 1, 1], [], []>} : vector<8x32xbf16>, vector<32x128xbf16>, vector<8x128xf32> -> vector<8x128xf32>
    %143 = arith.addf %140, %142 : vector<8x128xf32>
    %144 = vector.extract_strided_slice %143 {offsets = [0, 0], sizes = [8, 32], strides = [1, 1]} : vector<8x128xf32> to vector<8x32xf32>
    %cst_58 = arith.constant 5.000000e-01 : f32
    %145 = vector.broadcast %cst_58 : f32 to vector<8x32xf32>
    %146 = arith.mulf %145, %144 : vector<8x32xf32>
    %147 = math.tanh %146 : vector<8x32xf32>
    %cst_59 = arith.constant 5.000000e-01 : f32
    %148 = vector.broadcast %cst_59 : f32 to vector<8x32xf32>
    %149 = arith.mulf %148, %147 : vector<8x32xf32>
    %cst_60 = arith.constant 5.000000e-01 : f32
    %150 = vector.broadcast %cst_60 : f32 to vector<8x32xf32>
    %151 = arith.addf %149, %150 : vector<8x32xf32>
    %152 = vector.extract_strided_slice %143 {offsets = [0, 32], sizes = [8, 32], strides = [1, 1]} : vector<8x128xf32> to vector<8x32xf32>
    %cst_61 = arith.constant 5.000000e-01 : f32
    %153 = vector.broadcast %cst_61 : f32 to vector<8x32xf32>
    %154 = arith.mulf %153, %152 : vector<8x32xf32>
    %155 = math.tanh %154 : vector<8x32xf32>
    %cst_62 = arith.constant 5.000000e-01 : f32
    %156 = vector.broadcast %cst_62 : f32 to vector<8x32xf32>
    %157 = arith.mulf %156, %155 : vector<8x32xf32>
    %cst_63 = arith.constant 5.000000e-01 : f32
    %158 = vector.broadcast %cst_63 : f32 to vector<8x32xf32>
    %159 = arith.addf %157, %158 : vector<8x32xf32>
    %160 = vector.extract_strided_slice %143 {offsets = [0, 64], sizes = [8, 32], strides = [1, 1]} : vector<8x128xf32> to vector<8x32xf32>
    %161 = math.tanh %160 : vector<8x32xf32>
    %162 = vector.extract_strided_slice %143 {offsets = [0, 96], sizes = [8, 32], strides = [1, 1]} : vector<8x128xf32> to vector<8x32xf32>
    %cst_64 = arith.constant 5.000000e-01 : f32
    %163 = vector.broadcast %cst_64 : f32 to vector<8x32xf32>
    %164 = arith.mulf %163, %162 : vector<8x32xf32>
    %165 = math.tanh %164 : vector<8x32xf32>
    %cst_65 = arith.constant 5.000000e-01 : f32
    %166 = vector.broadcast %cst_65 : f32 to vector<8x32xf32>
    %167 = arith.mulf %166, %165 : vector<8x32xf32>
    %cst_66 = arith.constant 5.000000e-01 : f32
    %168 = vector.broadcast %cst_66 : f32 to vector<8x32xf32>
    %169 = arith.addf %167, %168 : vector<8x32xf32>
    %170 = arith.mulf %159, %130 : vector<8x32xf32>
    %171 = arith.mulf %151, %161 : vector<8x32xf32>
    %172 = arith.addf %170, %171 : vector<8x32xf32>
    %173 = math.tanh %172 : vector<8x32xf32>
    %174 = arith.mulf %169, %173 : vector<8x32xf32>
    %175 = arith.truncf %174 : vector<8x32xf32> to vector<8x32xbf16>
    %176 = arith.index_cast %c3_i32 : i32 to index
    %c0_67 = arith.constant 0 : index
    %c0_68 = arith.constant 0 : index
    %177 = vector.load %arg5[%176, %c0_67, %c0_68] : memref<8x8x32xbf16, #tpu.memory_space<vmem>>, vector<1x8x32xbf16>
    %178 = vector.shape_cast %177 : vector<1x8x32xbf16> to vector<8x32xbf16>
    %179 = vector.shape_cast %175 : vector<8x32xbf16> to vector<1x8x32xbf16>
    tpu.vector_store %arg5[%176, %c0_67, %c0_68], %179 {strides = array<i32>} : memref<8x8x32xbf16, #tpu.memory_space<vmem>>, vector<1x8x32xbf16>,
    %c4_i32 = arith.constant 4 : i32
    %180 = arith.index_cast %c4_i32 : i32 to index
    %c0_69 = arith.constant 0 : index
    %c0_70 = arith.constant 0 : index
    %181 = vector.load %arg6[%180, %c0_69, %c0_70] : memref<8x8x128xf32, #tpu.memory_space<vmem>>, vector<1x8x128xf32>
    %182 = vector.shape_cast %181 : vector<1x8x128xf32> to vector<8x128xf32>
    %183 = arith.truncf %174 : vector<8x32xf32> to vector<8x32xbf16>
    %cst_71 = arith.constant dense<0.000000e+00> : vector<8x128xf32>
    %184 = tpu.matmul %183, %9, %cst_71 {dimension_numbers = #tpu.dot_dimension_numbers<[1], [0], [0], [1], [0, 0, 1, 1], [], []>} : vector<8x32xbf16>, vector<32x128xbf16>, vector<8x128xf32> -> vector<8x128xf32>
    %185 = arith.addf %182, %184 : vector<8x128xf32>
    %186 = vector.extract_strided_slice %185 {offsets = [0, 0], sizes = [8, 32], strides = [1, 1]} : vector<8x128xf32> to vector<8x32xf32>
    %cst_72 = arith.constant 5.000000e-01 : f32
    %187 = vector.broadcast %cst_72 : f32 to vector<8x32xf32>
    %188 = arith.mulf %187, %186 : vector<8x32xf32>
    %189 = math.tanh %188 : vector<8x32xf32>
    %cst_73 = arith.constant 5.000000e-01 : f32
    %190 = vector.broadcast %cst_73 : f32 to vector<8x32xf32>
    %191 = arith.mulf %190, %189 : vector<8x32xf32>
    %cst_74 = arith.constant 5.000000e-01 : f32
    %192 = vector.broadcast %cst_74 : f32 to vector<8x32xf32>
    %193 = arith.addf %191, %192 : vector<8x32xf32>
    %194 = vector.extract_strided_slice %185 {offsets = [0, 32], sizes = [8, 32], strides = [1, 1]} : vector<8x128xf32> to vector<8x32xf32>
    %cst_75 = arith.constant 5.000000e-01 : f32
    %195 = vector.broadcast %cst_75 : f32 to vector<8x32xf32>
    %196 = arith.mulf %195, %194 : vector<8x32xf32>
    %197 = math.tanh %196 : vector<8x32xf32>
    %cst_76 = arith.constant 5.000000e-01 : f32
    %198 = vector.broadcast %cst_76 : f32 to vector<8x32xf32>
    %199 = arith.mulf %198, %197 : vector<8x32xf32>
    %cst_77 = arith.constant 5.000000e-01 : f32
    %200 = vector.broadcast %cst_77 : f32 to vector<8x32xf32>
    %201 = arith.addf %199, %200 : vector<8x32xf32>
    %202 = vector.extract_strided_slice %185 {offsets = [0, 64], sizes = [8, 32], strides = [1, 1]} : vector<8x128xf32> to vector<8x32xf32>
    %203 = math.tanh %202 : vector<8x32xf32>
    %204 = vector.extract_strided_slice %185 {offsets = [0, 96], sizes = [8, 32], strides = [1, 1]} : vector<8x128xf32> to vector<8x32xf32>
    %cst_78 = arith.constant 5.000000e-01 : f32
    %205 = vector.broadcast %cst_78 : f32 to vector<8x32xf32>
    %206 = arith.mulf %205, %204 : vector<8x32xf32>
    %207 = math.tanh %206 : vector<8x32xf32>
    %cst_79 = arith.constant 5.000000e-01 : f32
    %208 = vector.broadcast %cst_79 : f32 to vector<8x32xf32>
    %209 = arith.mulf %208, %207 : vector<8x32xf32>
    %cst_80 = arith.constant 5.000000e-01 : f32
    %210 = vector.broadcast %cst_80 : f32 to vector<8x32xf32>
    %211 = arith.addf %209, %210 : vector<8x32xf32>
    %212 = arith.mulf %201, %172 : vector<8x32xf32>
    %213 = arith.mulf %193, %203 : vector<8x32xf32>
    %214 = arith.addf %212, %213 : vector<8x32xf32>
    %215 = math.tanh %214 : vector<8x32xf32>
    %216 = arith.mulf %211, %215 : vector<8x32xf32>
    %217 = arith.truncf %216 : vector<8x32xf32> to vector<8x32xbf16>
    %218 = arith.index_cast %c4_i32 : i32 to index
    %c0_81 = arith.constant 0 : index
    %c0_82 = arith.constant 0 : index
    %219 = vector.load %arg5[%218, %c0_81, %c0_82] : memref<8x8x32xbf16, #tpu.memory_space<vmem>>, vector<1x8x32xbf16>
    %220 = vector.shape_cast %219 : vector<1x8x32xbf16> to vector<8x32xbf16>
    %221 = vector.shape_cast %217 : vector<8x32xbf16> to vector<1x8x32xbf16>
    tpu.vector_store %arg5[%218, %c0_81, %c0_82], %221 {strides = array<i32>} : memref<8x8x32xbf16, #tpu.memory_space<vmem>>, vector<1x8x32xbf16>,
    %c5_i32 = arith.constant 5 : i32
    %222 = arith.index_cast %c5_i32 : i32 to index
    %c0_83 = arith.constant 0 : index
    %c0_84 = arith.constant 0 : index
    %223 = vector.load %arg6[%222, %c0_83, %c0_84] : memref<8x8x128xf32, #tpu.memory_space<vmem>>, vector<1x8x128xf32>
    %224 = vector.shape_cast %223 : vector<1x8x128xf32> to vector<8x128xf32>
    %225 = arith.truncf %216 : vector<8x32xf32> to vector<8x32xbf16>
    %cst_85 = arith.constant dense<0.000000e+00> : vector<8x128xf32>
    %226 = tpu.matmul %225, %9, %cst_85 {dimension_numbers = #tpu.dot_dimension_numbers<[1], [0], [0], [1], [0, 0, 1, 1], [], []>} : vector<8x32xbf16>, vector<32x128xbf16>, vector<8x128xf32> -> vector<8x128xf32>
    %227 = arith.addf %224, %226 : vector<8x128xf32>
    %228 = vector.extract_strided_slice %227 {offsets = [0, 0], sizes = [8, 32], strides = [1, 1]} : vector<8x128xf32> to vector<8x32xf32>
    %cst_86 = arith.constant 5.000000e-01 : f32
    %229 = vector.broadcast %cst_86 : f32 to vector<8x32xf32>
    %230 = arith.mulf %229, %228 : vector<8x32xf32>
    %231 = math.tanh %230 : vector<8x32xf32>
    %cst_87 = arith.constant 5.000000e-01 : f32
    %232 = vector.broadcast %cst_87 : f32 to vector<8x32xf32>
    %233 = arith.mulf %232, %231 : vector<8x32xf32>
    %cst_88 = arith.constant 5.000000e-01 : f32
    %234 = vector.broadcast %cst_88 : f32 to vector<8x32xf32>
    %235 = arith.addf %233, %234 : vector<8x32xf32>
    %236 = vector.extract_strided_slice %227 {offsets = [0, 32], sizes = [8, 32], strides = [1, 1]} : vector<8x128xf32> to vector<8x32xf32>
    %cst_89 = arith.constant 5.000000e-01 : f32
    %237 = vector.broadcast %cst_89 : f32 to vector<8x32xf32>
    %238 = arith.mulf %237, %236 : vector<8x32xf32>
    %239 = math.tanh %238 : vector<8x32xf32>
    %cst_90 = arith.constant 5.000000e-01 : f32
    %240 = vector.broadcast %cst_90 : f32 to vector<8x32xf32>
    %241 = arith.mulf %240, %239 : vector<8x32xf32>
    %cst_91 = arith.constant 5.000000e-01 : f32
    %242 = vector.broadcast %cst_91 : f32 to vector<8x32xf32>
    %243 = arith.addf %241, %242 : vector<8x32xf32>
    %244 = vector.extract_strided_slice %227 {offsets = [0, 64], sizes = [8, 32], strides = [1, 1]} : vector<8x128xf32> to vector<8x32xf32>
    %245 = math.tanh %244 : vector<8x32xf32>
    %246 = vector.extract_strided_slice %227 {offsets = [0, 96], sizes = [8, 32], strides = [1, 1]} : vector<8x128xf32> to vector<8x32xf32>
    %cst_92 = arith.constant 5.000000e-01 : f32
    %247 = vector.broadcast %cst_92 : f32 to vector<8x32xf32>
    %248 = arith.mulf %247, %246 : vector<8x32xf32>
    %249 = math.tanh %248 : vector<8x32xf32>
    %cst_93 = arith.constant 5.000000e-01 : f32
    %250 = vector.broadcast %cst_93 : f32 to vector<8x32xf32>
    %251 = arith.mulf %250, %249 : vector<8x32xf32>
    %cst_94 = arith.constant 5.000000e-01 : f32
    %252 = vector.broadcast %cst_94 : f32 to vector<8x32xf32>
    %253 = arith.addf %251, %252 : vector<8x32xf32>
    %254 = arith.mulf %243, %214 : vector<8x32xf32>
    %255 = arith.mulf %235, %245 : vector<8x32xf32>
    %256 = arith.addf %254, %255 : vector<8x32xf32>
    %257 = math.tanh %256 : vector<8x32xf32>
    %258 = arith.mulf %253, %257 : vector<8x32xf32>
    %259 = arith.truncf %258 : vector<8x32xf32> to vector<8x32xbf16>
    %260 = arith.index_cast %c5_i32 : i32 to index
    %c0_95 = arith.constant 0 : index
    %c0_96 = arith.constant 0 : index
    %261 = vector.load %arg5[%260, %c0_95, %c0_96] : memref<8x8x32xbf16, #tpu.memory_space<vmem>>, vector<1x8x32xbf16>
    %262 = vector.shape_cast %261 : vector<1x8x32xbf16> to vector<8x32xbf16>
    %263 = vector.shape_cast %259 : vector<8x32xbf16> to vector<1x8x32xbf16>
    tpu.vector_store %arg5[%260, %c0_95, %c0_96], %263 {strides = array<i32>} : memref<8x8x32xbf16, #tpu.memory_space<vmem>>, vector<1x8x32xbf16>,
    %c6_i32 = arith.constant 6 : i32
    %264 = arith.index_cast %c6_i32 : i32 to index
    %c0_97 = arith.constant 0 : index
    %c0_98 = arith.constant 0 : index
    %265 = vector.load %arg6[%264, %c0_97, %c0_98] : memref<8x8x128xf32, #tpu.memory_space<vmem>>, vector<1x8x128xf32>
    %266 = vector.shape_cast %265 : vector<1x8x128xf32> to vector<8x128xf32>
    %267 = arith.truncf %258 : vector<8x32xf32> to vector<8x32xbf16>
    %cst_99 = arith.constant dense<0.000000e+00> : vector<8x128xf32>
    %268 = tpu.matmul %267, %9, %cst_99 {dimension_numbers = #tpu.dot_dimension_numbers<[1], [0], [0], [1], [0, 0, 1, 1], [], []>} : vector<8x32xbf16>, vector<32x128xbf16>, vector<8x128xf32> -> vector<8x128xf32>
    %269 = arith.addf %266, %268 : vector<8x128xf32>
    %270 = vector.extract_strided_slice %269 {offsets = [0, 0], sizes = [8, 32], strides = [1, 1]} : vector<8x128xf32> to vector<8x32xf32>
    %cst_100 = arith.constant 5.000000e-01 : f32
    %271 = vector.broadcast %cst_100 : f32 to vector<8x32xf32>
    %272 = arith.mulf %271, %270 : vector<8x32xf32>
    %273 = math.tanh %272 : vector<8x32xf32>
    %cst_101 = arith.constant 5.000000e-01 : f32
    %274 = vector.broadcast %cst_101 : f32 to vector<8x32xf32>
    %275 = arith.mulf %274, %273 : vector<8x32xf32>
    %cst_102 = arith.constant 5.000000e-01 : f32
    %276 = vector.broadcast %cst_102 : f32 to vector<8x32xf32>
    %277 = arith.addf %275, %276 : vector<8x32xf32>
    %278 = vector.extract_strided_slice %269 {offsets = [0, 32], sizes = [8, 32], strides = [1, 1]} : vector<8x128xf32> to vector<8x32xf32>
    %cst_103 = arith.constant 5.000000e-01 : f32
    %279 = vector.broadcast %cst_103 : f32 to vector<8x32xf32>
    %280 = arith.mulf %279, %278 : vector<8x32xf32>
    %281 = math.tanh %280 : vector<8x32xf32>
    %cst_104 = arith.constant 5.000000e-01 : f32
    %282 = vector.broadcast %cst_104 : f32 to vector<8x32xf32>
    %283 = arith.mulf %282, %281 : vector<8x32xf32>
    %cst_105 = arith.constant 5.000000e-01 : f32
    %284 = vector.broadcast %cst_105 : f32 to vector<8x32xf32>
    %285 = arith.addf %283, %284 : vector<8x32xf32>
    %286 = vector.extract_strided_slice %269 {offsets = [0, 64], sizes = [8, 32], strides = [1, 1]} : vector<8x128xf32> to vector<8x32xf32>
    %287 = math.tanh %286 : vector<8x32xf32>
    %288 = vector.extract_strided_slice %269 {offsets = [0, 96], sizes = [8, 32], strides = [1, 1]} : vector<8x128xf32> to vector<8x32xf32>
    %cst_106 = arith.constant 5.000000e-01 : f32
    %289 = vector.broadcast %cst_106 : f32 to vector<8x32xf32>
    %290 = arith.mulf %289, %288 : vector<8x32xf32>
    %291 = math.tanh %290 : vector<8x32xf32>
    %cst_107 = arith.constant 5.000000e-01 : f32
    %292 = vector.broadcast %cst_107 : f32 to vector<8x32xf32>
    %293 = arith.mulf %292, %291 : vector<8x32xf32>
    %cst_108 = arith.constant 5.000000e-01 : f32
    %294 = vector.broadcast %cst_108 : f32 to vector<8x32xf32>
    %295 = arith.addf %293, %294 : vector<8x32xf32>
    %296 = arith.mulf %285, %256 : vector<8x32xf32>
    %297 = arith.mulf %277, %287 : vector<8x32xf32>
    %298 = arith.addf %296, %297 : vector<8x32xf32>
    %299 = math.tanh %298 : vector<8x32xf32>
    %300 = arith.mulf %295, %299 : vector<8x32xf32>
    %301 = arith.truncf %300 : vector<8x32xf32> to vector<8x32xbf16>
    %302 = arith.index_cast %c6_i32 : i32 to index
    %c0_109 = arith.constant 0 : index
    %c0_110 = arith.constant 0 : index
    %303 = vector.load %arg5[%302, %c0_109, %c0_110] : memref<8x8x32xbf16, #tpu.memory_space<vmem>>, vector<1x8x32xbf16>
    %304 = vector.shape_cast %303 : vector<1x8x32xbf16> to vector<8x32xbf16>
    %305 = vector.shape_cast %301 : vector<8x32xbf16> to vector<1x8x32xbf16>
    tpu.vector_store %arg5[%302, %c0_109, %c0_110], %305 {strides = array<i32>} : memref<8x8x32xbf16, #tpu.memory_space<vmem>>, vector<1x8x32xbf16>,
    %c7_i32 = arith.constant 7 : i32
    %306 = arith.index_cast %c7_i32 : i32 to index
    %c0_111 = arith.constant 0 : index
    %c0_112 = arith.constant 0 : index
    %307 = vector.load %arg6[%306, %c0_111, %c0_112] : memref<8x8x128xf32, #tpu.memory_space<vmem>>, vector<1x8x128xf32>
    %308 = vector.shape_cast %307 : vector<1x8x128xf32> to vector<8x128xf32>
    %309 = arith.truncf %300 : vector<8x32xf32> to vector<8x32xbf16>
    %cst_113 = arith.constant dense<0.000000e+00> : vector<8x128xf32>
    %310 = tpu.matmul %309, %9, %cst_113 {dimension_numbers = #tpu.dot_dimension_numbers<[1], [0], [0], [1], [0, 0, 1, 1], [], []>} : vector<8x32xbf16>, vector<32x128xbf16>, vector<8x128xf32> -> vector<8x128xf32>
    %311 = arith.addf %308, %310 : vector<8x128xf32>
    %312 = vector.extract_strided_slice %311 {offsets = [0, 0], sizes = [8, 32], strides = [1, 1]} : vector<8x128xf32> to vector<8x32xf32>
    %cst_114 = arith.constant 5.000000e-01 : f32
    %313 = vector.broadcast %cst_114 : f32 to vector<8x32xf32>
    %314 = arith.mulf %313, %312 : vector<8x32xf32>
    %315 = math.tanh %314 : vector<8x32xf32>
    %cst_115 = arith.constant 5.000000e-01 : f32
    %316 = vector.broadcast %cst_115 : f32 to vector<8x32xf32>
    %317 = arith.mulf %316, %315 : vector<8x32xf32>
    %cst_116 = arith.constant 5.000000e-01 : f32
    %318 = vector.broadcast %cst_116 : f32 to vector<8x32xf32>
    %319 = arith.addf %317, %318 : vector<8x32xf32>
    %320 = vector.extract_strided_slice %311 {offsets = [0, 32], sizes = [8, 32], strides = [1, 1]} : vector<8x128xf32> to vector<8x32xf32>
    %cst_117 = arith.constant 5.000000e-01 : f32
    %321 = vector.broadcast %cst_117 : f32 to vector<8x32xf32>
    %322 = arith.mulf %321, %320 : vector<8x32xf32>
    %323 = math.tanh %322 : vector<8x32xf32>
    %cst_118 = arith.constant 5.000000e-01 : f32
    %324 = vector.broadcast %cst_118 : f32 to vector<8x32xf32>
    %325 = arith.mulf %324, %323 : vector<8x32xf32>
    %cst_119 = arith.constant 5.000000e-01 : f32
    %326 = vector.broadcast %cst_119 : f32 to vector<8x32xf32>
    %327 = arith.addf %325, %326 : vector<8x32xf32>
    %328 = vector.extract_strided_slice %311 {offsets = [0, 64], sizes = [8, 32], strides = [1, 1]} : vector<8x128xf32> to vector<8x32xf32>
    %329 = math.tanh %328 : vector<8x32xf32>
    %330 = vector.extract_strided_slice %311 {offsets = [0, 96], sizes = [8, 32], strides = [1, 1]} : vector<8x128xf32> to vector<8x32xf32>
    %cst_120 = arith.constant 5.000000e-01 : f32
    %331 = vector.broadcast %cst_120 : f32 to vector<8x32xf32>
    %332 = arith.mulf %331, %330 : vector<8x32xf32>
    %333 = math.tanh %332 : vector<8x32xf32>
    %cst_121 = arith.constant 5.000000e-01 : f32
    %334 = vector.broadcast %cst_121 : f32 to vector<8x32xf32>
    %335 = arith.mulf %334, %333 : vector<8x32xf32>
    %cst_122 = arith.constant 5.000000e-01 : f32
    %336 = vector.broadcast %cst_122 : f32 to vector<8x32xf32>
    %337 = arith.addf %335, %336 : vector<8x32xf32>
    %338 = arith.mulf %327, %298 : vector<8x32xf32>
    %339 = arith.mulf %319, %329 : vector<8x32xf32>
    %340 = arith.addf %338, %339 : vector<8x32xf32>
    %341 = math.tanh %340 : vector<8x32xf32>
    %342 = arith.mulf %337, %341 : vector<8x32xf32>
    %343 = arith.truncf %342 : vector<8x32xf32> to vector<8x32xbf16>
    %344 = arith.index_cast %c7_i32 : i32 to index
    %c0_123 = arith.constant 0 : index
    %c0_124 = arith.constant 0 : index
    %345 = vector.load %arg5[%344, %c0_123, %c0_124] : memref<8x8x32xbf16, #tpu.memory_space<vmem>>, vector<1x8x32xbf16>
    %346 = vector.shape_cast %345 : vector<1x8x32xbf16> to vector<8x32xbf16>
    %347 = vector.shape_cast %343 : vector<8x32xbf16> to vector<1x8x32xbf16>
    tpu.vector_store %arg5[%344, %c0_123, %c0_124], %347 {strides = array<i32>} : memref<8x8x32xbf16, #tpu.memory_space<vmem>>, vector<1x8x32xbf16>,
    %c8_i32 = arith.constant 8 : i32
    return
  }
  func.func @transform_0(%arg0: i32) -> (i32, i32, i32) {
    %c0_i32 = arith.constant 0 : i32
    %c0_i32_0 = arith.constant 0 : i32
    %c0_i32_1 = arith.constant 0 : i32
    return %c0_i32, %arg0, %c0_i32_0 : i32, i32, i32
  }
  func.func @transform_1(%arg0: i32) -> (i32, i32) {
    %c0_i32 = arith.constant 0 : i32
    %c0_i32_0 = arith.constant 0 : i32
    %c0_i32_1 = arith.constant 0 : i32
    return %c0_i32, %c0_i32_0 : i32, i32
  }
  func.func @transform_2(%arg0: i32) -> (i32, i32) {
    %c0_i32 = arith.constant 0 : i32
    %c0_i32_0 = arith.constant 0 : i32
    %c0_i32_1 = arith.constant 0 : i32
    return %c0_i32, %c0_i32_0 : i32, i32
  }
  func.func @transform_3(%arg0: i32) -> (i32, i32) {
    %c0_i32 = arith.constant 0 : i32
    %c0_i32_0 = arith.constant 0 : i32
    %c0_i32_1 = arith.constant 0 : i32
    return %c0_i32, %c0_i32_0 : i32, i32
  }
  func.func @transform_4(%arg0: i32) -> (i32, i32, i32) {
    %c0_i32 = arith.constant 0 : i32
    %c0_i32_0 = arith.constant 0 : i32
    %c0_i32_1 = arith.constant 0 : i32
    return %c0_i32, %arg0, %c0_i32_0 : i32, i32, i32
  }
}

</mosaic_0001>

<llo_original>
// kernel: decoder_rnn_forward.3
$region0: #{decoder_rnn_forward.3}
  #allocation0 [shape = 'u32[]', space=smem, size = 0x4, offset = 0x4, fixed_abs, tag = 'smem constant byte address 0x4 - core index']
  #allocation1 [shape = 'u32[144,128]{1,0:T(1,128)}', space=vmem, size = 0x12000, scoped, tag = 'internal scratch']
  %s0 = inlined_call_operand.vmem [shape: bf16[64,32], index: 0, kind: input, shape index: {}]
  %s1 = inlined_call_operand.vmem [shape: bf16[32,128], index: 1, kind: input, shape index: {}]
  %s2 = inlined_call_operand.vmem [shape: f32[1,128], index: 2, kind: input, shape index: {}]
  %s3 = inlined_call_operand.vmem [shape: f32[64,128], index: 3, kind: output, shape index: {}]
  %s4 = sld [smem:[#allocation0]]
  $region22: #{decoder_rnn_forward.3} parent=0
    _
  %s6 = ssub.s32 1, %s4
  %s7 = scalar_select 0, %s6, %s4
  // Predicated region
  $region2: #{decoder_rnn_forward.3} parent=0 // pred_check
    _
  $region3: #{decoder_rnn_forward.3} parent=0 // pred_check_branch
    %9 = sbr.rel (0) target = $region5
  $region4: #{decoder_rnn_forward.3} parent=0 // pred_region
    _
  $region5: #{decoder_rnn_forward.3} parent=0 // pred_fallthru
    _
  // Predicated region
  $region6: #{decoder_rnn_forward.3} parent=0 // pred_check
    _
  $region7: #{decoder_rnn_forward.3} parent=0 // pred_check_branch
    %11 = sbr.rel (0) target = $region9
  $region8: #{decoder_rnn_forward.3} parent=0 // pred_region
    _
  $region9: #{decoder_rnn_forward.3} parent=0 // pred_fallthru
    _
  // Predicated region
  $region10: #{decoder_rnn_forward.3} parent=0 // pred_check
    _
  $region11: #{decoder_rnn_forward.3} parent=0 // pred_check_branch
    %13 = sbr.rel (0) target = $region13
  $region12: #{decoder_rnn_forward.3} parent=0 // pred_region
    _
  $region13: #{decoder_rnn_forward.3} parent=0 // pred_fallthru
    _
  %v15 = vld [vmem:[%s0] sm:$0xf]
  %v16 = vld [vmem:[%s0 + $0x4] sm:$0xf]
  %v17 = vld [vmem:[%s0 + $0x8] sm:$0xf]
  %v18 = vld [vmem:[%s0 + $0xc] sm:$0xf]
  %v19 = vld [vmem:[%s0 + $0x10] sm:$0xf]
  %v20 = vld [vmem:[%s0 + $0x14] sm:$0xf]
  %v21 = vld [vmem:[%s0 + $0x18] sm:$0xf]
  %v22 = vld [vmem:[%s0 + $0x1c] sm:$0xf]
  %v23 = vld [vmem:[%s1] sm:$0xf]
  %v24 = vld [vmem:[%s1 + $0x4] sm:$0xf]
  %v25 = vld [vmem:[%s1 + $0x8] sm:$0xf]
  %v26 = vld [vmem:[%s1 + $0xc] sm:$0xf]
  %v27 = vld [vmem:[%s2] sm:$0x1]
  %v29 = vlaneseq
  %v30 = vshrl.u32 %v29, 7
  %v31 = vsub.s32 0, %v30
  %v32 = vrot.slane %v27, %v31
  %v42 = vunpack.c.l.b16 %v15
  %v43 = vunpack.c.l.b16 %v16
  %v44 = vunpack.c.l.b16 %v17
  %v45 = vunpack.c.l.b16 %v18
  %v46 = vunpack.c.l.b16 %v19
  %v47 = vunpack.c.l.b16 %v20
  %v48 = vunpack.c.l.b16 %v21
  %v49 = vunpack.c.l.b16 %v22
  %v50 = vpack.c.b16 %v43, %v42
  %v51 = vpack.c.b16 %v45, %v44
  %v52 = vpack.c.b16 %v47, %v46
  %v53 = vpack.c.b16 %v49, %v48
  %v58 = vunpack.c.l.b16 %v23
  %v59 = vunpack.c.l.b16 %v24
  %v60 = vunpack.c.l.b16 %v25
  %v61 = vunpack.c.l.b16 %v26
  %v62 = vpack.c.b16 %v59, %v58
  %v63 = vpack.c.b16 %v61, %v60
  %vm66 = vcmask 261120
  %v68 = vsel %vm66, %v50, 0
  %v71 = vsel %vm66, %v51, 0
  %v74 = vsel %vm66, %v52, 0
  %v77 = vsel %vm66, %v53, 0
  %79 = vmatprep.subr.bf16.mxu0 0
  %80 = vmatpush1.bf16.msra.mxu0 %v62
  %81 = vmatprep.subr.bf16.mxu0 0
  %82 = vmatpush1.bf16.msra.mxu0 %v63
  %83 = vmatprep.subr.bf16.mxu0 0
  %84 = vmatpush1.bf16.msra.mxu0 0
  %85 = vmatprep.subr.bf16.mxu0 0
  %86 = vmatpush1.bf16.msra.mxu0 0
  %87 = vmatprep.subr.bf16.mxu0 0
  %88 = vmatpush1.bf16.msra.mxu0 0
  %89 = vmatprep.subr.bf16.mxu0 0
  %90 = vmatpush1.bf16.msra.mxu0 0
  %91 = vmatprep.subr.bf16.mxu0 0
  %92 = vmatpush1.bf16.msra.mxu0 0
  %93 = vmatprep.subr.bf16.mxu0 0
  %94 = vmatpush1.bf16.msra.mxu0 0
  %95 = vmatprep.subr.bf16.mxu0 0
  %96 = vmatpush1.bf16.msra.mxu0 0
  %97 = vmatprep.subr.bf16.mxu0 0
  %98 = vmatpush1.bf16.msra.mxu0 0
  %99 = vmatprep.subr.bf16.mxu0 0
  %100 = vmatpush1.bf16.msra.mxu0 0
  %101 = vmatprep.subr.bf16.mxu0 0
  %102 = vmatpush1.bf16.msra.mxu0 0
  %103 = vmatprep.subr.bf16.mxu0 0
  %104 = vmatpush1.bf16.msra.mxu0 0
  %105 = vmatprep.subr.bf16.mxu0 0
  %106 = vmatpush1.bf16.msra.mxu0 0
  %107 = vmatprep.subr.bf16.mxu0 0
  %108 = vmatpush1.bf16.msra.mxu0 0
  %109 = vmatprep.subr.bf16.mxu0 0
  %110 = vmatpush1.bf16.msra.mxu0 0
  %111 = vmatprep.mubr.bf16.mxu0 0
  %112 = vmatmul.mubr.bf16.gmra.mrb[0].mxu0 %v68
  %v113 = vpop.f32.mrb[0].mxu0
  %v114 = vadd.f32 %v32, %v113
  %v115 = vpop.f32.mrb[0].mxu0
  %v116 = vpop.f32.mrb[0].mxu0
  %v117 = vadd.f32 %v32, %v116
  %v118 = vpop.f32.mrb[0].mxu0
  %119 = vmatprep.mubr.bf16.mxu0 0
  %120 = vmatmul.mubr.bf16.gmra.mrb[0].mxu0 %v71
  %v121 = vpop.f32.mrb[0].mxu0
  %v122 = vadd.f32 %v32, %v121
  %v123 = vpop.f32.mrb[0].mxu0
  %v124 = vpop.f32.mrb[0].mxu0
  %v125 = vadd.f32 %v32, %v124
  %v126 = vpop.f32.mrb[0].mxu0
  %127 = vmatprep.mubr.bf16.mxu0 0
  %128 = vmatmul.mubr.bf16.gmra.mrb[0].mxu0 %v74
  %v129 = vpop.f32.mrb[0].mxu0
  %v130 = vadd.f32 %v32, %v129
  %v131 = vpop.f32.mrb[0].mxu0
  %v132 = vpop.f32.mrb[0].mxu0
  %v133 = vadd.f32 %v32, %v132
  %v134 = vpop.f32.mrb[0].mxu0
  %135 = vmatprep.mubr.bf16.mxu0 0
  %136 = vmatmul.mubr.bf16.gmra.mrb[0].mxu0 %v77
  %v137 = vpop.f32.mrb[0].mxu0
  %v138 = vadd.f32 %v32, %v137
  %v139 = vpop.f32.mrb[0].mxu0
  %v140 = vpop.f32.mrb[0].mxu0
  %v141 = vadd.f32 %v32, %v140
  %v142 = vpop.f32.mrb[0].mxu0
  %143 = vdwg.mxu0
  %144 = vst [vmem:[%s3] sm:$0xff] %v114
  %145 = vst [vmem:[%s3 + $0x8] sm:$0xff] %v117
  %146 = vst [vmem:[%s3 + $0x10] sm:$0xff] %v122
  %147 = vst [vmem:[%s3 + $0x18] sm:$0xff] %v125
  %148 = vst [vmem:[%s3 + $0x20] sm:$0xff] %v130
  %149 = vst [vmem:[%s3 + $0x28] sm:$0xff] %v133
  %150 = vst [vmem:[%s3 + $0x30] sm:$0xff] %v138
  %151 = vst [vmem:[%s3 + $0x38] sm:$0xff] %v141
  // Predicated region
  $region14: #{decoder_rnn_forward.3} parent=0 // pred_check
    _
  $region15: #{decoder_rnn_forward.3} parent=0 // pred_check_branch
    %153 = sbr.rel (0) target = $region17
  $region16: #{decoder_rnn_forward.3} parent=0 // pred_region
    _
  $region17: #{decoder_rnn_forward.3} parent=0 // pred_fallthru
    _
  // Predicated region
  $region18: #{decoder_rnn_forward.3} parent=0 // pred_check
    _
  $region19: #{decoder_rnn_forward.3} parent=0 // pred_check_branch
    %155 = sbr.rel (0) target = $region21
  $region20: #{decoder_rnn_forward.3} parent=0 // pred_region
    _
  $region21: #{decoder_rnn_forward.3} parent=0 // pred_fallthru
    _

// kernel: decoder_rnn_forward.2
$region0: #{decoder_rnn_forward.2}
  #allocation0 [shape = 'u32[]', space=smem, size = 0x4, offset = 0x4, fixed_abs, tag = 'smem constant byte address 0x4 - core index']
  #allocation1 [shape = 'u32[144,128]{1,0:T(1,128)}', space=vmem, size = 0x12000, scoped, tag = 'internal scratch']
  #allocation2 [shape = 'f32[8,8,128]{2,1,0:T(8,128)}', space=vmem, size = 0x8000, scoped, tag = 'scratch operand']
  %s0 = inlined_call_operand.vmem [shape: bf16[8,8,32], index: 0, kind: input, shape index: {}]
  %s1 = inlined_call_operand.vmem [shape: bf16[32,128], index: 1, kind: input, shape index: {}]
  %s2 = inlined_call_operand.vmem [shape: bf16[32,128], index: 2, kind: input, shape index: {}]
  %s3 = inlined_call_operand.vmem [shape: f32[1,128], index: 3, kind: input, shape index: {}]
  %s4 = inlined_call_operand.vmem [shape: bf16[8,8,32], index: 4, kind: output, shape index: {}]
  %s5 = sld [smem:[#allocation0]]
  $region26: #{decoder_rnn_forward.2} parent=0
    _
  %s7 = ssub.s32 1, %s5
  %s8 = scalar_select 0, %s7, %s5
  // Predicated region
  $region2: #{decoder_rnn_forward.2} parent=0 // pred_check
    _
  $region3: #{decoder_rnn_forward.2} parent=0 // pred_check_branch
    %10 = sbr.rel (0) target = $region5
  $region4: #{decoder_rnn_forward.2} parent=0 // pred_region
    _
  $region5: #{decoder_rnn_forward.2} parent=0 // pred_fallthru
    _
  // Predicated region
  $region6: #{decoder_rnn_forward.2} parent=0 // pred_check
    _
  $region7: #{decoder_rnn_forward.2} parent=0 // pred_check_branch
    %12 = sbr.rel (0) target = $region9
  $region8: #{decoder_rnn_forward.2} parent=0 // pred_region
    _
  $region9: #{decoder_rnn_forward.2} parent=0 // pred_fallthru
    _
  // Predicated region
  $region10: #{decoder_rnn_forward.2} parent=0 // pred_check
    _
  $region11: #{decoder_rnn_forward.2} parent=0 // pred_check_branch
    %14 = sbr.rel (0) target = $region13
  $region12: #{decoder_rnn_forward.2} parent=0 // pred_region
    _
  $region13: #{decoder_rnn_forward.2} parent=0 // pred_fallthru
    _
  // Predicated region
  $region14: #{decoder_rnn_forward.2} parent=0 // pred_check
    _
  $region15: #{decoder_rnn_forward.2} parent=0 // pred_check_branch
    %16 = sbr.rel (0) target = $region17
  $region16: #{decoder_rnn_forward.2} parent=0 // pred_region
    _
  $region17: #{decoder_rnn_forward.2} parent=0 // pred_fallthru
    _
  %v18 = vld [vmem:[%s0] sm:$0xf]
  %v19 = vld [vmem:[%s0 + $0x4] sm:$0xf]
  %v20 = vld [vmem:[%s0 + $0x8] sm:$0xf]
  %v21 = vld [vmem:[%s0 + $0xc] sm:$0xf]
  %v22 = vld [vmem:[%s0 + $0x10] sm:$0xf]
  %v23 = vld [vmem:[%s0 + $0x14] sm:$0xf]
  %v24 = vld [vmem:[%s0 + $0x18] sm:$0xf]
  %v25 = vld [vmem:[%s0 + $0x1c] sm:$0xf]
  %v26 = vld [vmem:[%s1] sm:$0xf]
  %v27 = vld [vmem:[%s1 + $0x4] sm:$0xf]
  %v28 = vld [vmem:[%s1 + $0x8] sm:$0xf]
  %v29 = vld [vmem:[%s1 + $0xc] sm:$0xf]
  %v30 = vld [vmem:[%s3] sm:$0x1]
  %v32 = vlaneseq
  %v33 = vshrl.u32 %v32, 7
  %v34 = vsub.s32 0, %v33
  %v35 = vrot.slane %v30, %v34
  %v45 = vunpack.c.l.b16 %v18
  %v46 = vunpack.c.l.b16 %v19
  %v47 = vunpack.c.l.b16 %v20
  %v48 = vunpack.c.l.b16 %v21
  %v49 = vunpack.c.l.b16 %v22
  %v50 = vunpack.c.l.b16 %v23
  %v51 = vunpack.c.l.b16 %v24
  %v52 = vunpack.c.l.b16 %v25
  %v53 = vpack.c.b16 %v46, %v45
  %v54 = vpack.c.b16 %v48, %v47
  %v55 = vpack.c.b16 %v50, %v49
  %v56 = vpack.c.b16 %v52, %v51
  %v61 = vunpack.c.l.b16 %v26
  %v62 = vunpack.c.l.b16 %v27
  %v63 = vunpack.c.l.b16 %v28
  %v64 = vunpack.c.l.b16 %v29
  %v65 = vpack.c.b16 %v62, %v61
  %v66 = vpack.c.b16 %v64, %v63
  %vm69 = vcmask 261120
  %v71 = vsel %vm69, %v53, 0
  %v74 = vsel %vm69, %v54, 0
  %v77 = vsel %vm69, %v55, 0
  %v80 = vsel %vm69, %v56, 0
  %82 = vmatprep.subr.bf16.mxu0 0
  %83 = vmatpush1.bf16.msra.mxu0 %v65
  %84 = vmatprep.subr.bf16.mxu0 0
  %85 = vmatpush1.bf16.msra.mxu0 %v66
  %86 = vmatprep.subr.bf16.mxu0 0
  %87 = vmatpush1.bf16.msra.mxu0 0
  %88 = vmatprep.subr.bf16.mxu0 0
  %89 = vmatpush1.bf16.msra.mxu0 0
  %90 = vmatprep.subr.bf16.mxu0 0
  %91 = vmatpush1.bf16.msra.mxu0 0
  %92 = vmatprep.subr.bf16.mxu0 0
  %93 = vmatpush1.bf16.msra.mxu0 0
  %94 = vmatprep.subr.bf16.mxu0 0
  %95 = vmatpush1.bf16.msra.mxu0 0
  %96 = vmatprep.subr.bf16.mxu0 0
  %97 = vmatpush1.bf16.msra.mxu0 0
  %98 = vmatprep.subr.bf16.mxu0 0
  %99 = vmatpush1.bf16.msra.mxu0 0
  %100 = vmatprep.subr.bf16.mxu0 0
  %101 = vmatpush1.bf16.msra.mxu0 0
  %102 = vmatprep.subr.bf16.mxu0 0
  %103 = vmatpush1.bf16.msra.mxu0 0
  %104 = vmatprep.subr.bf16.mxu0 0
  %105 = vmatpush1.bf16.msra.mxu0 0
  %106 = vmatprep.subr.bf16.mxu0 0
  %107 = vmatpush1.bf16.msra.mxu0 0
  %108 = vmatprep.subr.bf16.mxu0 0
  %109 = vmatpush1.bf16.msra.mxu0 0
  %110 = vmatprep.subr.bf16.mxu0 0
  %111 = vmatpush1.bf16.msra.mxu0 0
  %112 = vmatprep.subr.bf16.mxu0 0
  %113 = vmatpush1.bf16.msra.mxu0 0
  %114 = vmatprep.mubr.bf16.mxu0 0
  %115 = vmatmul.mubr.bf16.gmra.mrb[0].mxu0 %v71
  %v116 = vpop.f32.mrb[0].mxu0
  %v117 = vadd.f32 %v35, %v116
  %v118 = vpop.f32.mrb[0].mxu0
  %v119 = vpop.f32.mrb[0].mxu0
  %v120 = vadd.f32 %v35, %v119
  %v121 = vpop.f32.mrb[0].mxu0
  %122 = vmatprep.mubr.bf16.mxu0 0
  %123 = vmatmul.mubr.bf16.gmra.mrb[0].mxu0 %v74
  %v124 = vpop.f32.mrb[0].mxu0
  %v125 = vadd.f32 %v35, %v124
  %v126 = vpop.f32.mrb[0].mxu0
  %v127 = vpop.f32.mrb[0].mxu0
  %v128 = vadd.f32 %v35, %v127
  %v129 = vpop.f32.mrb[0].mxu0
  %130 = vmatprep.mubr.bf16.mxu0 0
  %131 = vmatmul.mubr.bf16.gmra.mrb[0].mxu0 %v77
  %v132 = vpop.f32.mrb[0].mxu0
  %v133 = vadd.f32 %v35, %v132
  %v134 = vpop.f32.mrb[0].mxu0
  %v135 = vpop.f32.mrb[0].mxu0
  %v136 = vadd.f32 %v35, %v135
  %v137 = vpop.f32.mrb[0].mxu0
  %138 = vmatprep.mubr.bf16.mxu0 0
  %139 = vmatmul.mubr.bf16.gmra.mrb[0].mxu0 %v80
  %v140 = vpop.f32.mrb[0].mxu0
  %v141 = vadd.f32 %v35, %v140
  %v142 = vpop.f32.mrb[0].mxu0
  %v143 = vpop.f32.mrb[0].mxu0
  %v144 = vadd.f32 %v35, %v143
  %v145 = vpop.f32.mrb[0].mxu0
  %146 = vdwg.mxu0
  %147 = vst [vmem:[#allocation2] sm:$0xff] %v117
  %148 = vst [vmem:[#allocation2 + $0x8] sm:$0xff] %v120
  %149 = vst [vmem:[#allocation2 + $0x10] sm:$0xff] %v125
  %150 = vst [vmem:[#allocation2 + $0x18] sm:$0xff] %v128
  %151 = vst [vmem:[#allocation2 + $0x20] sm:$0xff] %v133
  %152 = vst [vmem:[#allocation2 + $0x28] sm:$0xff] %v136
  %153 = vst [vmem:[#allocation2 + $0x30] sm:$0xff] %v141
  %154 = vst [vmem:[#allocation2 + $0x38] sm:$0xff] %v144
  %v155 = vld [vmem:[%s2] sm:$0xf]
  %v156 = vld [vmem:[%s2 + $0x4] sm:$0xf]
  %v157 = vld [vmem:[%s2 + $0x8] sm:$0xf]
  %v158 = vld [vmem:[%s2 + $0xc] sm:$0xf]
  %v159 = vld [vmem:[#allocation2] sm:$0xff]
  %v164 = vunpack.c.l.b16 %v155
  %v165 = vunpack.c.l.b16 %v156
  %v166 = vunpack.c.l.b16 %v157
  %v167 = vunpack.c.l.b16 %v158
  %v168 = vpack.c.b16 %v165, %v164
  %v169 = vpack.c.b16 %v167, %v166
  %v173 = vsel %vm69, 0, 0
  %175 = vmatprep.subr.bf16.mxu0 0
  %176 = vmatpush1.bf16.msra.mxu0 %v168
  %177 = vmatprep.subr.bf16.mxu0 0
  %178 = vmatpush1.bf16.msra.mxu0 %v169
  %179 = vmatprep.subr.bf16.mxu0 0
  %180 = vmatpush1.bf16.msra.mxu0 0
  %181 = vmatprep.subr.bf16.mxu0 0
  %182 = vmatpush1.bf16.msra.mxu0 0
  %183 = vmatprep.subr.bf16.mxu0 0
  %184 = vmatpush1.bf16.msra.mxu0 0
  %185 = vmatprep.subr.bf16.mxu0 0
  %186 = vmatpush1.bf16.msra.mxu0 0
  %187 = vmatprep.subr.bf16.mxu0 0
  %188 = vmatpush1.bf16.msra.mxu0 0
  %189 = vmatprep.subr.bf16.mxu0 0
  %190 = vmatpush1.bf16.msra.mxu0 0
  %191 = vmatprep.subr.bf16.mxu0 0
  %192 = vmatpush1.bf16.msra.mxu0 0
  %193 = vmatprep.subr.bf16.mxu0 0
  %194 = vmatpush1.bf16.msra.mxu0 0
  %195 = vmatprep.subr.bf16.mxu0 0
  %196 = vmatpush1.bf16.msra.mxu0 0
  %197 = vmatprep.subr.bf16.mxu0 0
  %198 = vmatpush1.bf16.msra.mxu0 0
  %199 = vmatprep.subr.bf16.mxu0 0
  %200 = vmatpush1.bf16.msra.mxu0 0
  %201 = vmatprep.subr.bf16.mxu0 0
  %202 = vmatpush1.bf16.msra.mxu0 0
  %203 = vmatprep.subr.bf16.mxu0 0
  %204 = vmatpush1.bf16.msra.mxu0 0
  %205 = vmatprep.subr.bf16.mxu0 0
  %206 = vmatpush1.bf16.msra.mxu0 0
  %207 = vmatprep.mubr.bf16.mxu0 0
  %208 = vmatmul.mubr.bf16.gmra.mrb[0].mxu0 %v173
  %v209 = vpop.f32.mrb[0].mxu0
  %v210 = vadd.f32 0.0, %v209
  %v211 = vpop.f32.mrb[0].mxu0
  %v212 = vpop.f32.mrb[0].mxu0
  %v213 = vpop.f32.mrb[0].mxu0
  %214 = vdwg.mxu0
  %v215 = vadd.f32 %v159, %v210
  %v216 = vmul.f32 %v215, 0.5
  %v217 = vtanh.pop %v216
  %v218 = vmul.f32 %v217, 0.5
  %v219 = vadd.f32 %v218, 0.5
  %v220 = vtanh.pop %v215
  %v221 = vmul.f32 %v219, 0.0
  %223 = vrot.lane.b32.xlu0 %v220, 64
  %v224 = vpop.permute.xlu0 %223
  %v226 = vmul.f32 %v219, %v224
  %228 = vrot.lane.b32.xlu0 %v226, 32
  %v229 = vpop.permute.xlu0 %228
  %v231 = vadd.f32 %v221, %v229
  %v232 = vtanh.pop %v231
  %234 = vrot.lane.b32.xlu0 %v232, 64
  %v235 = vpop.permute.xlu0 %234
  %v237 = vmul.f32 %v219, %v235
  %v238 = vpack.c.bf16 %v237, %v237
  %v240 = vunpack.c.l.b16 %v238
  %v241 = vpack.c.b16 %v240, %v240
  %242 = vrot.lane.b32.xlu0 %v241, 32
  %v243 = vpop.permute.xlu0 %242
  %vm245 = vcmask 257024
  %246 = vst.msk [vmem:[%s4] sm:$0xf] %vm245, %v243
  %s247 = scalar_lea.vmem [#allocation2], 8
  %v248 = vld [vmem:[%s247] sm:$0xff]
  %249 = vrot.lane.b32.xlu0 %v238, 32
  %v250 = vpop.permute.xlu0 %249
  %v252 = vsel %vm69, %v250, 0
  %254 = vmatprep.subr.bf16.mxu0 0
  %255 = vmatpush1.bf16.msra.mxu0 %v168
  %256 = vmatprep.subr.bf16.mxu0 0
  %257 = vmatpush1.bf16.msra.mxu0 %v169
  %258 = vmatprep.subr.bf16.mxu0 0
  %259 = vmatpush1.bf16.msra.mxu0 0
  %260 = vmatprep.subr.bf16.mxu0 0
  %261 = vmatpush1.bf16.msra.mxu0 0
  %262 = vmatprep.subr.bf16.mxu0 0
  %263 = vmatpush1.bf16.msra.mxu0 0
  %264 = vmatprep.subr.bf16.mxu0 0
  %265 = vmatpush1.bf16.msra.mxu0 0
  %266 = vmatprep.subr.bf16.mxu0 0
  %267 = vmatpush1.bf16.msra.mxu0 0
  %268 = vmatprep.subr.bf16.mxu0 0
  %269 = vmatpush1.bf16.msra.mxu0 0
  %270 = vmatprep.subr.bf16.mxu0 0
  %271 = vmatpush1.bf16.msra.mxu0 0
  %272 = vmatprep.subr.bf16.mxu0 0
  %273 = vmatpush1.bf16.msra.mxu0 0
  %274 = vmatprep.subr.bf16.mxu0 0
  %275 = vmatpush1.bf16.msra.mxu0 0
  %276 = vmatprep.subr.bf16.mxu0 0
  %277 = vmatpush1.bf16.msra.mxu0 0
  %278 = vmatprep.subr.bf16.mxu0 0
  %279 = vmatpush1.bf16.msra.mxu0 0
  %280 = vmatprep.subr.bf16.mxu0 0
  %281 = vmatpush1.bf16.msra.mxu0 0
  %282 = vmatprep.subr.bf16.mxu0 0
  %283 = vmatpush1.bf16.msra.mxu0 0
  %284 = vmatprep.subr.bf16.mxu0 0
  %285 = vmatpush1.bf16.msra.mxu0 0
  %286 = vmatprep.mubr.bf16.mxu0 0
  %287 = vmatmul.mubr.bf16.gmra.mrb[0].mxu0 %v252
  %v288 = vpop.f32.mrb[0].mxu0
  %v289 = vadd.f32 0.0, %v288
  %v290 = vpop.f32.mrb[0].mxu0
  %v291 = vpop.f32.mrb[0].mxu0
  %v292 = vpop.f32.mrb[0].mxu0
  %293 = vdwg.mxu0
  %v294 = vadd.f32 %v248, %v289
  %v295 = vmul.f32 %v294, 0.5
  %v296 = vtanh.pop %v295
  %v297 = vmul.f32 %v296, 0.5
  %v298 = vadd.f32 %v297, 0.5
  %v299 = vtanh.pop %v294
  %v300 = vmul.f32 %v298, %v231
  %302 = vrot.lane.b32.xlu0 %v299, 64
  %v303 = vpop.permute.xlu0 %302
  %v305 = vmul.f32 %v298, %v303
  %307 = vrot.lane.b32.xlu0 %v305, 32
  %v308 = vpop.permute.xlu0 %307
  %v310 = vadd.f32 %v300, %v308
  %v311 = vtanh.pop %v310
  %313 = vrot.lane.b32.xlu0 %v311, 64
  %v314 = vpop.permute.xlu0 %313
  %v316 = vmul.f32 %v298, %v314
  %v317 = vpack.c.bf16 %v316, %v316
  %v319 = vunpack.c.l.b16 %v317
  %v320 = vpack.c.b16 %v319, %v319
  %321 = vrot.lane.b32.xlu0 %v320, 32
  %v322 = vpop.permute.xlu0 %321
  %s324 = scalar_lea.vmem %s4, 4
  %325 = vst.msk [vmem:[%s324] sm:$0xf] %vm245, %v322
  %s326 = scalar_lea.vmem [#allocation2], 16
  %v327 = vld [vmem:[%s326] sm:$0xff]
  %328 = vrot.lane.b32.xlu0 %v317, 32
  %v329 = vpop.permute.xlu0 %328
  %v331 = vsel %vm69, %v329, 0
  %333 = vmatprep.subr.bf16.mxu0 0
  %334 = vmatpush1.bf16.msra.mxu0 %v168
  %335 = vmatprep.subr.bf16.mxu0 0
  %336 = vmatpush1.bf16.msra.mxu0 %v169
  %337 = vmatprep.subr.bf16.mxu0 0
  %338 = vmatpush1.bf16.msra.mxu0 0
  %339 = vmatprep.subr.bf16.mxu0 0
  %340 = vmatpush1.bf16.msra.mxu0 0
  %341 = vmatprep.subr.bf16.mxu0 0
  %342 = vmatpush1.bf16.msra.mxu0 0
  %343 = vmatprep.subr.bf16.mxu0 0
  %344 = vmatpush1.bf16.msra.mxu0 0
  %345 = vmatprep.subr.bf16.mxu0 0
  %346 = vmatpush1.bf16.msra.mxu0 0
  %347 = vmatprep.subr.bf16.mxu0 0
  %348 = vmatpush1.bf16.msra.mxu0 0
  %349 = vmatprep.subr.bf16.mxu0 0
  %350 = vmatpush1.bf16.msra.mxu0 0
  %351 = vmatprep.subr.bf16.mxu0 0
  %352 = vmatpush1.bf16.msra.mxu0 0
  %353 = vmatprep.subr.bf16.mxu0 0
  %354 = vmatpush1.bf16.msra.mxu0 0
  %355 = vmatprep.subr.bf16.mxu0 0
  %356 = vmatpush1.bf16.msra.mxu0 0
  %357 = vmatprep.subr.bf16.mxu0 0
  %358 = vmatpush1.bf16.msra.mxu0 0
  %359 = vmatprep.subr.bf16.mxu0 0
  %360 = vmatpush1.bf16.msra.mxu0 0
  %361 = vmatprep.subr.bf16.mxu0 0
  %362 = vmatpush1.bf16.msra.mxu0 0
  %363 = vmatprep.subr.bf16.mxu0 0
  %364 = vmatpush1.bf16.msra.mxu0 0
  %365 = vmatprep.mubr.bf16.mxu0 0
  %366 = vmatmul.mubr.bf16.gmra.mrb[0].mxu0 %v331
  %v367 = vpop.f32.mrb[0].mxu0
  %v368 = vadd.f32 0.0, %v367
  %v369 = vpop.f32.mrb[0].mxu0
  %v370 = vpop.f32.mrb[0].mxu0
  %v371 = vpop.f32.mrb[0].mxu0
  %372 = vdwg.mxu0
  %v373 = vadd.f32 %v327, %v368
  %v374 = vmul.f32 %v373, 0.5
  %v375 = vtanh.pop %v374
  %v376 = vmul.f32 %v375, 0.5
  %v377 = vadd.f32 %v376, 0.5
  %v378 = vtanh.pop %v373
  %v379 = vmul.f32 %v377, %v310
  %381 = vrot.lane.b32.xlu0 %v378, 64
  %v382 = vpop.permute.xlu0 %381
  %v384 = vmul.f32 %v377, %v382
  %386 = vrot.lane.b32.xlu0 %v384, 32
  %v387 = vpop.permute.xlu0 %386
  %v389 = vadd.f32 %v379, %v387
  %v390 = vtanh.pop %v389
  %392 = vrot.lane.b32.xlu0 %v390, 64
  %v393 = vpop.permute.xlu0 %392
  %v395 = vmul.f32 %v377, %v393
  %v396 = vpack.c.bf16 %v395, %v395
  %v398 = vunpack.c.l.b16 %v396
  %v399 = vpack.c.b16 %v398, %v398
  %400 = vrot.lane.b32.xlu0 %v399, 32
  %v401 = vpop.permute.xlu0 %400
  %s403 = scalar_lea.vmem %s4, 8
  %404 = vst.msk [vmem:[%s403] sm:$0xf] %vm245, %v401
  %s405 = scalar_lea.vmem [#allocation2], 24
  %v406 = vld [vmem:[%s405] sm:$0xff]
  %407 = vrot.lane.b32.xlu0 %v396, 32
  %v408 = vpop.permute.xlu0 %407
  %v410 = vsel %vm69, %v408, 0
  %412 = vmatprep.subr.bf16.mxu0 0
  %413 = vmatpush1.bf16.msra.mxu0 %v168
  %414 = vmatprep.subr.bf16.mxu0 0
  %415 = vmatpush1.bf16.msra.mxu0 %v169
  %416 = vmatprep.subr.bf16.mxu0 0
  %417 = vmatpush1.bf16.msra.mxu0 0
  %418 = vmatprep.subr.bf16.mxu0 0
  %419 = vmatpush1.bf16.msra.mxu0 0
  %420 = vmatprep.subr.bf16.mxu0 0
  %421 = vmatpush1.bf16.msra.mxu0 0
  %422 = vmatprep.subr.bf16.mxu0 0
  %423 = vmatpush1.bf16.msra.mxu0 0
  %424 = vmatprep.subr.bf16.mxu0 0
  %425 = vmatpush1.bf16.msra.mxu0 0
  %426 = vmatprep.subr.bf16.mxu0 0
  %427 = vmatpush1.bf16.msra.mxu0 0
  %428 = vmatprep.subr.bf16.mxu0 0
  %429 = vmatpush1.bf16.msra.mxu0 0
  %430 = vmatprep.subr.bf16.mxu0 0
  %431 = vmatpush1.bf16.msra.mxu0 0
  %432 = vmatprep.subr.bf16.mxu0 0
  %433 = vmatpush1.bf16.msra.mxu0 0
  %434 = vmatprep.subr.bf16.mxu0 0
  %435 = vmatpush1.bf16.msra.mxu0 0
  %436 = vmatprep.subr.bf16.mxu0 0
  %437 = vmatpush1.bf16.msra.mxu0 0
  %438 = vmatprep.subr.bf16.mxu0 0
  %439 = vmatpush1.bf16.msra.mxu0 0
  %440 = vmatprep.subr.bf16.mxu0 0
  %441 = vmatpush1.bf16.msra.mxu0 0
  %442 = vmatprep.subr.bf16.mxu0 0
  %443 = vmatpush1.bf16.msra.mxu0 0
  %444 = vmatprep.mubr.bf16.mxu0 0
  %445 = vmatmul.mubr.bf16.gmra.mrb[0].mxu0 %v410
  %v446 = vpop.f32.mrb[0].mxu0
  %v447 = vadd.f32 0.0, %v446
  %v448 = vpop.f32.mrb[0].mxu0
  %v449 = vpop.f32.mrb[0].mxu0
  %v450 = vpop.f32.mrb[0].mxu0
  %451 = vdwg.mxu0
  %v452 = vadd.f32 %v406, %v447
  %v453 = vmul.f32 %v452, 0.5
  %v454 = vtanh.pop %v453
  %v455 = vmul.f32 %v454, 0.5
  %v456 = vadd.f32 %v455, 0.5
  %v457 = vtanh.pop %v452
  %v458 = vmul.f32 %v456, %v389
  %460 = vrot.lane.b32.xlu0 %v457, 64
  %v461 = vpop.permute.xlu0 %460
  %v463 = vmul.f32 %v456, %v461
  %465 = vrot.lane.b32.xlu0 %v463, 32
  %v466 = vpop.permute.xlu0 %465
  %v468 = vadd.f32 %v458, %v466
  %v469 = vtanh.pop %v468
  %471 = vrot.lane.b32.xlu0 %v469, 64
  %v472 = vpop.permute.xlu0 %471
  %v474 = vmul.f32 %v456, %v472
  %v475 = vpack.c.bf16 %v474, %v474
  %v477 = vunpack.c.l.b16 %v475
  %v478 = vpack.c.b16 %v477, %v477
  %479 = vrot.lane.b32.xlu0 %v478, 32
  %v480 = vpop.permute.xlu0 %479
  %s482 = scalar_lea.vmem %s4, 12
  %483 = vst.msk [vmem:[%s482] sm:$0xf] %vm245, %v480
  %s484 = scalar_lea.vmem [#allocation2], 32
  %v485 = vld [vmem:[%s484] sm:$0xff]
  %486 = vrot.lane.b32.xlu0 %v475, 32
  %v487 = vpop.permute.xlu0 %486
  %v489 = vsel %vm69, %v487, 0
  %491 = vmatprep.subr.bf16.mxu0 0
  %492 = vmatpush1.bf16.msra.mxu0 %v168
  %493 = vmatprep.subr.bf16.mxu0 0
  %494 = vmatpush1.bf16.msra.mxu0 %v169
  %495 = vmatprep.subr.bf16.mxu0 0
  %496 = vmatpush1.bf16.msra.mxu0 0
  %497 = vmatprep.subr.bf16.mxu0 0
  %498 = vmatpush1.bf16.msra.mxu0 0
  %499 = vmatprep.subr.bf16.mxu0 0
  %500 = vmatpush1.bf16.msra.mxu0 0
  %501 = vmatprep.subr.bf16.mxu0 0
  %502 = vmatpush1.bf16.msra.mxu0 0
  %503 = vmatprep.subr.bf16.mxu0 0
  %504 = vmatpush1.bf16.msra.mxu0 0
  %505 = vmatprep.subr.bf16.mxu0 0
  %506 = vmatpush1.bf16.msra.mxu0 0
  %507 = vmatprep.subr.bf16.mxu0 0
  %508 = vmatpush1.bf16.msra.mxu0 0
  %509 = vmatprep.subr.bf16.mxu0 0
  %510 = vmatpush1.bf16.msra.mxu0 0
  %511 = vmatprep.subr.bf16.mxu0 0
  %512 = vmatpush1.bf16.msra.mxu0 0
  %513 = vmatprep.subr.bf16.mxu0 0
  %514 = vmatpush1.bf16.msra.mxu0 0
  %515 = vmatprep.subr.bf16.mxu0 0
  %516 = vmatpush1.bf16.msra.mxu0 0
  %517 = vmatprep.subr.bf16.mxu0 0
  %518 = vmatpush1.bf16.msra.mxu0 0
  %519 = vmatprep.subr.bf16.mxu0 0
  %520 = vmatpush1.bf16.msra.mxu0 0
  %521 = vmatprep.subr.bf16.mxu0 0
  %522 = vmatpush1.bf16.msra.mxu0 0
  %523 = vmatprep.mubr.bf16.mxu0 0
  %524 = vmatmul.mubr.bf16.gmra.mrb[0].mxu0 %v489
  %v525 = vpop.f32.mrb[0].mxu0
  %v526 = vadd.f32 0.0, %v525
  %v527 = vpop.f32.mrb[0].mxu0
  %v528 = vpop.f32.mrb[0].mxu0
  %v529 = vpop.f32.mrb[0].mxu0
  %530 = vdwg.mxu0
  %v531 = vadd.f32 %v485, %v526
  %v532 = vmul.f32 %v531, 0.5
  %v533 = vtanh.pop %v532
  %v534 = vmul.f32 %v533, 0.5
  %v535 = vadd.f32 %v534, 0.5
  %v536 = vtanh.pop %v531
  %v537 = vmul.f32 %v535, %v468
  %539 = vrot.lane.b32.xlu0 %v536, 64
  %v540 = vpop.permute.xlu0 %539
  %v542 = vmul.f32 %v535, %v540
  %544 = vrot.lane.b32.xlu0 %v542, 32
  %v545 = vpop.permute.xlu0 %544
  %v547 = vadd.f32 %v537, %v545
  %v548 = vtanh.pop %v547
  %550 = vrot.lane.b32.xlu0 %v548, 64
  %v551 = vpop.permute.xlu0 %550
  %v553 = vmul.f32 %v535, %v551
  %v554 = vpack.c.bf16 %v553, %v553
  %v556 = vunpack.c.l.b16 %v554
  %v557 = vpack.c.b16 %v556, %v556
  %558 = vrot.lane.b32.xlu0 %v557, 32
  %v559 = vpop.permute.xlu0 %558
  %s561 = scalar_lea.vmem %s4, 16
  %562 = vst.msk [vmem:[%s561] sm:$0xf] %vm245, %v559
  %s563 = scalar_lea.vmem [#allocation2], 40
  %v564 = vld [vmem:[%s563] sm:$0xff]
  %565 = vrot.lane.b32.xlu0 %v554, 32
  %v566 = vpop.permute.xlu0 %565
  %v568 = vsel %vm69, %v566, 0
  %570 = vmatprep.subr.bf16.mxu0 0
  %571 = vmatpush1.bf16.msra.mxu0 %v168
  %572 = vmatprep.subr.bf16.mxu0 0
  %573 = vmatpush1.bf16.msra.mxu0 %v169
  %574 = vmatprep.subr.bf16.mxu0 0
  %575 = vmatpush1.bf16.msra.mxu0 0
  %576 = vmatprep.subr.bf16.mxu0 0
  %577 = vmatpush1.bf16.msra.mxu0 0
  %578 = vmatprep.subr.bf16.mxu0 0
  %579 = vmatpush1.bf16.msra.mxu0 0
  %580 = vmatprep.subr.bf16.mxu0 0
  %581 = vmatpush1.bf16.msra.mxu0 0
  %582 = vmatprep.subr.bf16.mxu0 0
  %583 = vmatpush1.bf16.msra.mxu0 0
  %584 = vmatprep.subr.bf16.mxu0 0
  %585 = vmatpush1.bf16.msra.mxu0 0
  %586 = vmatprep.subr.bf16.mxu0 0
  %587 = vmatpush1.bf16.msra.mxu0 0
  %588 = vmatprep.subr.bf16.mxu0 0
  %589 = vmatpush1.bf16.msra.mxu0 0
  %590 = vmatprep.subr.bf16.mxu0 0
  %591 = vmatpush1.bf16.msra.mxu0 0
  %592 = vmatprep.subr.bf16.mxu0 0
  %593 = vmatpush1.bf16.msra.mxu0 0
  %594 = vmatprep.subr.bf16.mxu0 0
  %595 = vmatpush1.bf16.msra.mxu0 0
  %596 = vmatprep.subr.bf16.mxu0 0
  %597 = vmatpush1.bf16.msra.mxu0 0
  %598 = vmatprep.subr.bf16.mxu0 0
  %599 = vmatpush1.bf16.msra.mxu0 0
  %600 = vmatprep.subr.bf16.mxu0 0
  %601 = vmatpush1.bf16.msra.mxu0 0
  %602 = vmatprep.mubr.bf16.mxu0 0
  %603 = vmatmul.mubr.bf16.gmra.mrb[0].mxu0 %v568
  %v604 = vpop.f32.mrb[0].mxu0
  %v605 = vadd.f32 0.0, %v604
  %v606 = vpop.f32.mrb[0].mxu0
  %v607 = vpop.f32.mrb[0].mxu0
  %v608 = vpop.f32.mrb[0].mxu0
  %609 = vdwg.mxu0
  %v610 = vadd.f32 %v564, %v605
  %v611 = vmul.f32 %v610, 0.5
  %v612 = vtanh.pop %v611
  %v613 = vmul.f32 %v612, 0.5
  %v614 = vadd.f32 %v613, 0.5
  %v615 = vtanh.pop %v610
  %v616 = vmul.f32 %v614, %v547
  %618 = vrot.lane.b32.xlu0 %v615, 64
  %v619 = vpop.permute.xlu0 %618
  %v621 = vmul.f32 %v614, %v619
  %623 = vrot.lane.b32.xlu0 %v621, 32
  %v624 = vpop.permute.xlu0 %623
  %v626 = vadd.f32 %v616, %v624
  %v627 = vtanh.pop %v626
  %629 = vrot.lane.b32.xlu0 %v627, 64
  %v630 = vpop.permute.xlu0 %629
  %v632 = vmul.f32 %v614, %v630
  %v633 = vpack.c.bf16 %v632, %v632
  %v635 = vunpack.c.l.b16 %v633
  %v636 = vpack.c.b16 %v635, %v635
  %637 = vrot.lane.b32.xlu0 %v636, 32
  %v638 = vpop.permute.xlu0 %637
  %s640 = scalar_lea.vmem %s4, 20
  %641 = vst.msk [vmem:[%s640] sm:$0xf] %vm245, %v638
  %s642 = scalar_lea.vmem [#allocation2], 48
  %v643 = vld [vmem:[%s642] sm:$0xff]
  %644 = vrot.lane.b32.xlu0 %v633, 32
  %v645 = vpop.permute.xlu0 %644
  %v647 = vsel %vm69, %v645, 0
  %649 = vmatprep.subr.bf16.mxu0 0
  %650 = vmatpush1.bf16.msra.mxu0 %v168
  %651 = vmatprep.subr.bf16.mxu0 0
  %652 = vmatpush1.bf16.msra.mxu0 %v169
  %653 = vmatprep.subr.bf16.mxu0 0
  %654 = vmatpush1.bf16.msra.mxu0 0
  %655 = vmatprep.subr.bf16.mxu0 0
  %656 = vmatpush1.bf16.msra.mxu0 0
  %657 = vmatprep.subr.bf16.mxu0 0
  %658 = vmatpush1.bf16.msra.mxu0 0
  %659 = vmatprep.subr.bf16.mxu0 0
  %660 = vmatpush1.bf16.msra.mxu0 0
  %661 = vmatprep.subr.bf16.mxu0 0
  %662 = vmatpush1.bf16.msra.mxu0 0
  %663 = vmatprep.subr.bf16.mxu0 0
  %664 = vmatpush1.bf16.msra.mxu0 0
  %665 = vmatprep.subr.bf16.mxu0 0
  %666 = vmatpush1.bf16.msra.mxu0 0
  %667 = vmatprep.subr.bf16.mxu0 0
  %668 = vmatpush1.bf16.msra.mxu0 0
  %669 = vmatprep.subr.bf16.mxu0 0
  %670 = vmatpush1.bf16.msra.mxu0 0
  %671 = vmatprep.subr.bf16.mxu0 0
  %672 = vmatpush1.bf16.msra.mxu0 0
  %673 = vmatprep.subr.bf16.mxu0 0
  %674 = vmatpush1.bf16.msra.mxu0 0
  %675 = vmatprep.subr.bf16.mxu0 0
  %676 = vmatpush1.bf16.msra.mxu0 0
  %677 = vmatprep.subr.bf16.mxu0 0
  %678 = vmatpush1.bf16.msra.mxu0 0
  %679 = vmatprep.subr.bf16.mxu0 0
  %680 = vmatpush1.bf16.msra.mxu0 0
  %681 = vmatprep.mubr.bf16.mxu0 0
  %682 = vmatmul.mubr.bf16.gmra.mrb[0].mxu0 %v647
  %v683 = vpop.f32.mrb[0].mxu0
  %v684 = vadd.f32 0.0, %v683
  %v685 = vpop.f32.mrb[0].mxu0
  %v686 = vpop.f32.mrb[0].mxu0
  %v687 = vpop.f32.mrb[0].mxu0
  %688 = vdwg.mxu0
  %v689 = vadd.f32 %v643, %v684
  %v690 = vmul.f32 %v689, 0.5
  %v691 = vtanh.pop %v690
  %v692 = vmul.f32 %v691, 0.5
  %v693 = vadd.f32 %v692, 0.5
  %v694 = vtanh.pop %v689
  %v695 = vmul.f32 %v693, %v626
  %697 = vrot.lane.b32.xlu0 %v694, 64
  %v698 = vpop.permute.xlu0 %697
  %v700 = vmul.f32 %v693, %v698
  %702 = vrot.lane.b32.xlu0 %v700, 32
  %v703 = vpop.permute.xlu0 %702
  %v705 = vadd.f32 %v695, %v703
  %v706 = vtanh.pop %v705
  %708 = vrot.lane.b32.xlu0 %v706, 64
  %v709 = vpop.permute.xlu0 %708
  %v711 = vmul.f32 %v693, %v709
  %v712 = vpack.c.bf16 %v711, %v711
  %v714 = vunpack.c.l.b16 %v712
  %v715 = vpack.c.b16 %v714, %v714
  %716 = vrot.lane.b32.xlu0 %v715, 32
  %v717 = vpop.permute.xlu0 %716
  %s719 = scalar_lea.vmem %s4, 24
  %720 = vst.msk [vmem:[%s719] sm:$0xf] %vm245, %v717
  %s721 = scalar_lea.vmem [#allocation2], 56
  %v722 = vld [vmem:[%s721] sm:$0xff]
  %723 = vrot.lane.b32.xlu0 %v712, 32
  %v724 = vpop.permute.xlu0 %723
  %v726 = vsel %vm69, %v724, 0
  %728 = vmatprep.subr.bf16.mxu0 0
  %729 = vmatpush1.bf16.msra.mxu0 %v168
  %730 = vmatprep.subr.bf16.mxu0 0
  %731 = vmatpush1.bf16.msra.mxu0 %v169
  %732 = vmatprep.subr.bf16.mxu0 0
  %733 = vmatpush1.bf16.msra.mxu0 0
  %734 = vmatprep.subr.bf16.mxu0 0
  %735 = vmatpush1.bf16.msra.mxu0 0
  %736 = vmatprep.subr.bf16.mxu0 0
  %737 = vmatpush1.bf16.msra.mxu0 0
  %738 = vmatprep.subr.bf16.mxu0 0
  %739 = vmatpush1.bf16.msra.mxu0 0
  %740 = vmatprep.subr.bf16.mxu0 0
  %741 = vmatpush1.bf16.msra.mxu0 0
  %742 = vmatprep.subr.bf16.mxu0 0
  %743 = vmatpush1.bf16.msra.mxu0 0
  %744 = vmatprep.subr.bf16.mxu0 0
  %745 = vmatpush1.bf16.msra.mxu0 0
  %746 = vmatprep.subr.bf16.mxu0 0
  %747 = vmatpush1.bf16.msra.mxu0 0
  %748 = vmatprep.subr.bf16.mxu0 0
  %749 = vmatpush1.bf16.msra.mxu0 0
  %750 = vmatprep.subr.bf16.mxu0 0
  %751 = vmatpush1.bf16.msra.mxu0 0
  %752 = vmatprep.subr.bf16.mxu0 0
  %753 = vmatpush1.bf16.msra.mxu0 0
  %754 = vmatprep.subr.bf16.mxu0 0
  %755 = vmatpush1.bf16.msra.mxu0 0
  %756 = vmatprep.subr.bf16.mxu0 0
  %757 = vmatpush1.bf16.msra.mxu0 0
  %758 = vmatprep.subr.bf16.mxu0 0
  %759 = vmatpush1.bf16.msra.mxu0 0
  %760 = vmatprep.mubr.bf16.mxu0 0
  %761 = vmatmul.mubr.bf16.gmra.mrb[0].mxu0 %v726
  %v762 = vpop.f32.mrb[0].mxu0
  %v763 = vadd.f32 0.0, %v762
  %v764 = vpop.f32.mrb[0].mxu0
  %v765 = vpop.f32.mrb[0].mxu0
  %v766 = vpop.f32.mrb[0].mxu0
  %767 = vdwg.mxu0
  %v768 = vadd.f32 %v722, %v763
  %v769 = vmul.f32 %v768, 0.5
  %v770 = vtanh.pop %v769
  %v771 = vmul.f32 %v770, 0.5
  %v772 = vadd.f32 %v771, 0.5
  %v773 = vtanh.pop %v768
  %v774 = vmul.f32 %v772, %v705
  %776 = vrot.lane.b32.xlu0 %v773, 64
  %v777 = vpop.permute.xlu0 %776
  %v779 = vmul.f32 %v772, %v777
  %781 = vrot.lane.b32.xlu0 %v779, 32
  %v782 = vpop.permute.xlu0 %781
  %v784 = vadd.f32 %v774, %v782
  %v785 = vtanh.pop %v784
  %787 = vrot.lane.b32.xlu0 %v785, 64
  %v788 = vpop.permute.xlu0 %787
  %v790 = vmul.f32 %v772, %v788
  %v791 = vpack.c.bf16 %v790, %v790
  %v793 = vunpack.c.l.b16 %v791
  %v794 = vpack.c.b16 %v793, %v793
  %795 = vrot.lane.b32.xlu0 %v794, 32
  %v796 = vpop.permute.xlu0 %795
  %s798 = scalar_lea.vmem %s4, 28
  %799 = vst.msk [vmem:[%s798] sm:$0xf] %vm245, %v796
  // Predicated region
  $region18: #{decoder_rnn_forward.2} parent=0 // pred_check
    _
  $region19: #{decoder_rnn_forward.2} parent=0 // pred_check_branch
    %801 = sbr.rel (0) target = $region21
  $region20: #{decoder_rnn_forward.2} parent=0 // pred_region
    _
  $region21: #{decoder_rnn_forward.2} parent=0 // pred_fallthru
    _
  // Predicated region
  $region22: #{decoder_rnn_forward.2} parent=0 // pred_check
    _
  $region23: #{decoder_rnn_forward.2} parent=0 // pred_check_branch
    %803 = sbr.rel (0) target = $region25
  $region24: #{decoder_rnn_forward.2} parent=0 // pred_region
    _
  $region25: #{decoder_rnn_forward.2} parent=0 // pred_fallthru
    _

</llo_original>
